<compile_context>
chip_gen: v7x
topology: tpu7x:2x2x1
jax: 0.10.0
libtpu: 0.0.40
codegen_flags: <defaults>
</compile_context>

<pallas_src>
import functools

import jax
import jax.numpy as jnp
from jax.experimental import pallas as pl
from jax.experimental.pallas import tpu as pltpu

NGRID = 8                      # small synthetic grid -> input_size = 512
INPUT_SIZE = NGRID ** 3        # 512
H1 = 512
H2 = 256
NUM_CLASSES = 1
OUT_PAD = 128                  # lane-dense padded width of the final layer
ROW_GRAN = 128                 # batch-tile granularity (needed for output compaction)
DEFAULT_TM = 1024              # batch tile cap (multiple of 256 for v6e/v7x MXU)


def _round_up(x, m):
    return (x + m - 1) // m * m


def _leaky_relu(x, neg_slope=0.2):
    return jnp.where(x > 0, x, neg_slope * x)


def _discriminator_kernel(x_ref, w1_ref, b1_ref, w2_ref, b2_ref,
                          w3_ref, b3_ref, o_ref):
    """Fused 3-layer MLP forward for one (TM, INPUT_SIZE) batch tile.

    f32 input cast to bf16 in-body, bf16 MXU matmuls, f32 accumulation,
    f32 element-wise epilogue.  Output is compacted to a lane-dense
    (TM//128, 128) slab (only column 0 of the padded final layer is real).
    """
    x = x_ref[...].astype(jnp.bfloat16)                         # (TM, 512)

    # Layer 1: (TM, 512) @ (512, 512) + (1, 512) -> LeakyReLU(0.2)
    h1 = jnp.dot(x, w1_ref[...], preferred_element_type=jnp.float32) + b1_ref[...]
    h1 = _leaky_relu(h1)                                        # f32

    # Layer 2: (TM, 512) @ (512, 256) + (1, 256) -> LeakyReLU(0.2)
    h2 = jnp.dot(h1.astype(jnp.bfloat16), w2_ref[...],
                 preferred_element_type=jnp.float32) + b2_ref[...]
    h2 = _leaky_relu(h2)                                        # f32

    # Layer 3 (out dim padded 1 -> 128): (TM, 256) @ (256, 128) + (1, 128)
    logits = jnp.dot(h2.astype(jnp.bfloat16), w3_ref[...],
                     preferred_element_type=jnp.float32) + b3_ref[...]

    # Keep only the real column, apply sigmoid (TM transcendentals, not TM*128),
    # and compact to a lane-dense (TM//128, 128) slab for the HBM writeback.
    scores = jax.nn.sigmoid(logits[:, :NUM_CLASSES])            # (TM, 1) f32
    o_ref[...] = scores.reshape(o_ref.shape)


@functools.partial(jax.jit, static_argnames=("tm",))
def discriminator_forward(image, prepared_params, *, tm=DEFAULT_TM):
    """image: any shape with leading batch dim; flattened per-sample like
    torch's `image.view(image.size(0), -1)`.  `prepared_params` comes from
    `prepare_params` (bf16 weights, f32 biases, layer-3 pre-padded)."""
    b = image.shape[0]
    x = image.reshape(b, -1).astype(jnp.float32)                # (B, INPUT_SIZE)

    # Balanced batch tiling:
    #   * enough steps to respect the tile cap `tm`
    #   * >= 2 steps when b >= 16 so v7x megacore can shard the batch axis
    #   * tiles rounded up to 128 rows (output-compaction granularity)
    n_steps = max(1, pl.cdiv(b, tm))
    if b >= 16:
        n_steps = max(n_steps, 2)
    tm_eff = _round_up(pl.cdiv(b, n_steps), ROW_GRAN)
    b_pad = tm_eff * n_steps
    if b_pad != b:
        x = jnp.pad(x, ((0, b_pad - b), (0, 0)))

    w1, b1, w2, b2, w3p, b3p = prepared_params
    rows_per_tile = tm_eff // ROW_GRAN                          # compacted rows/step

    cost = pl.CostEstimate(
        flops=2 * b_pad * (INPUT_SIZE * H1 + H1 * H2 + H2 * OUT_PAD),
        transcendentals=b_pad,                                  # one sigmoid per row
        bytes_accessed=(x.size * 4                              # f32 activations in
                        + (w1.size + w2.size + w3p.size) * 2    # bf16 weights
                        + (b1.size + b2.size + b3p.size) * 4    # f32 biases
                        + b_pad * 4),                           # compacted f32 out
    )

    out_compact = pl.pallas_call(
        _discriminator_kernel,
        out_shape=jax.ShapeDtypeStruct((n_steps, rows_per_tile, 128), jnp.float32),
        grid=(n_steps,),
        in_specs=[
            pl.BlockSpec((tm_eff, INPUT_SIZE), lambda i: (i, 0)),   # x tile (f32)
            pl.BlockSpec((INPUT_SIZE, H1), lambda i: (0, 0)),       # w1 (resident)
            pl.BlockSpec((1, H1), lambda i: (0, 0)),                # b1 (resident)
            pl.BlockSpec((H1, H2), lambda i: (0, 0)),               # w2 (resident)
            pl.BlockSpec((1, H2), lambda i: (0, 0)),                # b2 (resident)
            pl.BlockSpec((H2, OUT_PAD), lambda i: (0, 0)),          # w3 padded (resident)
            pl.BlockSpec((1, OUT_PAD), lambda i: (0, 0)),           # b3 padded (resident)
        ],
        # First (grid) dim squeezed out of the kernel ref -> (rows_per_tile, 128).
        out_specs=pl.BlockSpec((None, rows_per_tile, 128), lambda i: (i, 0, 0)),
        compiler_params=pltpu.CompilerParams(
            dimension_semantics=("parallel",),   # megacore sharding on v7x
        ),
        cost_estimate=cost,
    )(x, w1, b1, w2, b2, w3p, b3p)

    # Undo the lane-dense compaction: row-major flatten restores batch order.
    return out_compact.reshape(b_pad, 1)[:b]                    # (B, 1)


def init_params(key):
    """Deterministic f32 init mimicking PyTorch's default Linear init
    (uniform(-1/sqrt(fan_in), 1/sqrt(fan_in))). Weights stored as (in, out)."""
    ks = jax.random.split(key, 6)

    def lin(kw, kb, fan_in, fan_out):
        bound = 1.0 / jnp.sqrt(fan_in)
        w = jax.random.uniform(kw, (fan_in, fan_out), jnp.float32, -bound, bound)
        b = jax.random.uniform(kb, (fan_out,), jnp.float32, -bound, bound)
        return w, b

    w1, b1 = lin(ks[0], ks[1], INPUT_SIZE, H1)
    w2, b2 = lin(ks[2], ks[3], H1, H2)
    w3, b3 = lin(ks[4], ks[5], H2, NUM_CLASSES)
    return (w1, b1, w2, b2, w3, b3)


def prepare_params(params):
    """One-time conversion for the kernel: bf16 weights (MXU native), f32
    (1, H) biases, and layer-3 zero-padded 1 -> OUT_PAD columns (hoisted out
    of the per-call forward path)."""
    w1, b1, w2, b2, w3, b3 = params
    w3p = jnp.zeros((H2, OUT_PAD), jnp.float32).at[:, :NUM_CLASSES].set(w3)
    b3p = jnp.zeros((1, OUT_PAD), jnp.float32).at[:, :NUM_CLASSES].set(b3)
    return (
        w1.astype(jnp.bfloat16),
        b1.reshape(1, H1).astype(jnp.float32),
        w2.astype(jnp.bfloat16),
        b2.reshape(1, H2).astype(jnp.float32),
        w3p.astype(jnp.bfloat16),
        b3p.astype(jnp.float32),
    )


def _reference_forward(image, params):
    """Pure-JAX f32 reference for a correctness sanity check."""
    b = image.shape[0]
    x = image.reshape(b, -1).astype(jnp.float32)
    w1, b1, w2, b2, w3, b3 = params

    def lrelu(v):
        return jnp.where(v > 0, v, 0.2 * v)

    h = lrelu(x @ w1 + b1)
    h = lrelu(h @ w2 + b2)
    return jax.nn.sigmoid(h @ w3 + b3)


if __name__ == "__main__":
    key = jax.random.PRNGKey(0)
    k_img, k_img2, k_param = jax.random.split(key, 3)

    params = init_params(k_param)
    prepped = prepare_params(params)

    # Small synthetic "3-D grid" images: (batch=4, NGRID, NGRID, NGRID)
    image = jax.random.normal(k_img, (4, NGRID, NGRID, NGRID), jnp.float32)
    out = discriminator_forward(image, prepped)
    jax.block_until_ready(out)
    ref = _reference_forward(image, params)
    assert out.shape == (4, 1), out.shape
    # bf16 matmul inputs (f32 accumulation) -> loosened tolerance vs f32 reference.
    assert jnp.allclose(out, ref, atol=2e-2, rtol=2e-2), "mismatch vs reference (b=4)"

    # Second small batch exercising the multi-step (>=2 tiles) grid path.
    image2 = jax.random.normal(k_img2, (20, NGRID, NGRID, NGRID), jnp.float32)
    out2 = discriminator_forward(image2, prepped)
    jax.block_until_ready(out2)
    ref2 = _reference_forward(image2, params)
    assert out2.shape == (20, 1), out2.shape
    assert jnp.allclose(out2, ref2, atol=2e-2, rtol=2e-2), "mismatch vs reference (b=20)"

    print("KERNEL_OK")
</pallas_src>

<mosaic_0001>
module attributes {stable_mosaic.version = 11 : i64} {
  func.func @_discriminator_kernel(%arg0: i32, %arg1: memref<128x512xf32, #tpu.memory_space<vmem>>, %arg2: memref<512x512xbf16, #tpu.memory_space<vmem>>, %arg3: memref<1x512xf32, #tpu.memory_space<vmem>>, %arg4: memref<512x256xbf16, #tpu.memory_space<vmem>>, %arg5: memref<1x256xf32, #tpu.memory_space<vmem>>, %arg6: memref<256x128xbf16, #tpu.memory_space<vmem>>, %arg7: memref<1x128xf32, #tpu.memory_space<vmem>>, %arg8: memref<1x1x128xf32, #tpu.memory_space<vmem>>) attributes {dimension_semantics = [#tpu.dimension_semantics<parallel>], iteration_bounds = array<i64: 1>, scalar_prefetch = 0 : i64, scratch_operands = 0 : i64, tpu.core_type = #tpu.core_type<tc>, window_params = [{transform_indices = @transform_0, window_bounds = array<i64: 128, 512>}, {pipeline_mode = #tpu.pipeline_mode<synchronous>, transform_indices = @transform_1, window_bounds = array<i64: 512, 512>}, {pipeline_mode = #tpu.pipeline_mode<synchronous>, transform_indices = @transform_2, window_bounds = array<i64: 1, 512>}, {pipeline_mode = #tpu.pipeline_mode<synchronous>, transform_indices = @transform_3, window_bounds = array<i64: 512, 256>}, {pipeline_mode = #tpu.pipeline_mode<synchronous>, transform_indices = @transform_4, window_bounds = array<i64: 1, 256>}, {pipeline_mode = #tpu.pipeline_mode<synchronous>, transform_indices = @transform_5, window_bounds = array<i64: 256, 128>}, {pipeline_mode = #tpu.pipeline_mode<synchronous>, transform_indices = @transform_6, window_bounds = array<i64: 1, 128>}, {transform_indices = @transform_7, window_bounds = array<i64: 1, 1, 128>}]} {
    %c0 = arith.constant 0 : index
    %c0_0 = arith.constant 0 : index
    %0 = vector.load %arg1[%c0, %c0_0] : memref<128x512xf32, #tpu.memory_space<vmem>>, vector<128x512xf32>
    %1 = arith.truncf %0 : vector<128x512xf32> to vector<128x512xbf16>
    %c0_1 = arith.constant 0 : index
    %c0_2 = arith.constant 0 : index
    %2 = vector.load %arg2[%c0_1, %c0_2] : memref<512x512xbf16, #tpu.memory_space<vmem>>, vector<512x512xbf16>
    %cst = arith.constant dense<0.000000e+00> : vector<128x512xf32>
    %3 = tpu.matmul %1, %2, %cst {dimension_numbers = #tpu.dot_dimension_numbers<[1], [0], [0], [1], [0, 0, 1, 1], [], []>} : vector<128x512xbf16>, vector<512x512xbf16>, vector<128x512xf32> -> vector<128x512xf32>
    %c0_3 = arith.constant 0 : index
    %c0_4 = arith.constant 0 : index
    %4 = vector.load %arg3[%c0_3, %c0_4] : memref<1x512xf32, #tpu.memory_space<vmem>>, vector<1x512xf32>
    %5 = vector.broadcast %4 : vector<1x512xf32> to vector<128x512xf32>
    %6 = arith.addf %3, %5 : vector<128x512xf32>
    %cst_5 = arith.constant 0.000000e+00 : f32
    %7 = vector.broadcast %cst_5 : f32 to vector<128x512xf32>
    %8 = arith.cmpf ogt, %6, %7 : vector<128x512xf32>
    %cst_6 = arith.constant 2.000000e-01 : f32
    %9 = vector.broadcast %cst_6 : f32 to vector<128x512xf32>
    %10 = arith.mulf %9, %6 : vector<128x512xf32>
    %11 = arith.select %8, %6, %10 : vector<128x512xi1>, vector<128x512xf32>
    %12 = arith.truncf %11 : vector<128x512xf32> to vector<128x512xbf16>
    %c0_7 = arith.constant 0 : index
    %c0_8 = arith.constant 0 : index
    %13 = vector.load %arg4[%c0_7, %c0_8] : memref<512x256xbf16, #tpu.memory_space<vmem>>, vector<512x256xbf16>
    %cst_9 = arith.constant dense<0.000000e+00> : vector<128x256xf32>
    %14 = tpu.matmul %12, %13, %cst_9 {dimension_numbers = #tpu.dot_dimension_numbers<[1], [0], [0], [1], [0, 0, 1, 1], [], []>} : vector<128x512xbf16>, vector<512x256xbf16>, vector<128x256xf32> -> vector<128x256xf32>
    %c0_10 = arith.constant 0 : index
    %c0_11 = arith.constant 0 : index
    %15 = vector.load %arg5[%c0_10, %c0_11] : memref<1x256xf32, #tpu.memory_space<vmem>>, vector<1x256xf32>
    %16 = vector.broadcast %15 : vector<1x256xf32> to vector<128x256xf32>
    %17 = arith.addf %14, %16 : vector<128x256xf32>
    %cst_12 = arith.constant 0.000000e+00 : f32
    %18 = vector.broadcast %cst_12 : f32 to vector<128x256xf32>
    %19 = arith.cmpf ogt, %17, %18 : vector<128x256xf32>
    %cst_13 = arith.constant 2.000000e-01 : f32
    %20 = vector.broadcast %cst_13 : f32 to vector<128x256xf32>
    %21 = arith.mulf %20, %17 : vector<128x256xf32>
    %22 = arith.select %19, %17, %21 : vector<128x256xi1>, vector<128x256xf32>
    %23 = arith.truncf %22 : vector<128x256xf32> to vector<128x256xbf16>
    %c0_14 = arith.constant 0 : index
    %c0_15 = arith.constant 0 : index
    %24 = vector.load %arg6[%c0_14, %c0_15] : memref<256x128xbf16, #tpu.memory_space<vmem>>, vector<256x128xbf16>
    %cst_16 = arith.constant dense<0.000000e+00> : vector<128x128xf32>
    %25 = tpu.matmul %23, %24, %cst_16 {dimension_numbers = #tpu.dot_dimension_numbers<[1], [0], [0], [1], [0, 0, 1, 1], [], []>} : vector<128x256xbf16>, vector<256x128xbf16>, vector<128x128xf32> -> vector<128x128xf32>
    %c0_17 = arith.constant 0 : index
    %c0_18 = arith.constant 0 : index
    %26 = vector.load %arg7[%c0_17, %c0_18] : memref<1x128xf32, #tpu.memory_space<vmem>>, vector<1x128xf32>
    %27 = vector.broadcast %26 : vector<1x128xf32> to vector<128x128xf32>
    %28 = arith.addf %25, %27 : vector<128x128xf32>
    %29 = vector.extract_strided_slice %28 {offsets = [0, 0], sizes = [128, 1], strides = [1, 1]} : vector<128x128xf32> to vector<128x1xf32>
    %30 = arith.negf %29 : vector<128x1xf32>
    %31 = math.exp %30 : vector<128x1xf32>
    %cst_19 = arith.constant 1.000000e+00 : f32
    %32 = vector.broadcast %cst_19 : f32 to vector<128x1xf32>
    %33 = arith.addf %32, %31 : vector<128x1xf32>
    %34 = arith.divf %32, %33 : vector<128x1xf32>
    %35 = vector.shape_cast %34 : vector<128x1xf32> to vector<1x128xf32>
    %c0_20 = arith.constant 0 : index
    %c0_21 = arith.constant 0 : index
    %c0_22 = arith.constant 0 : index
    %36 = vector.load %arg8[%c0_20, %c0_21, %c0_22] : memref<1x1x128xf32, #tpu.memory_space<vmem>>, vector<1x1x128xf32>
    %37 = vector.shape_cast %36 : vector<1x1x128xf32> to vector<1x128xf32>
    %38 = vector.shape_cast %35 : vector<1x128xf32> to vector<1x1x128xf32>
    tpu.vector_store %arg8[%c0_20, %c0_21, %c0_22], %38 {strides = array<i32>} : memref<1x1x128xf32, #tpu.memory_space<vmem>>, vector<1x1x128xf32>,
    return
  }
  func.func @transform_0(%arg0: i32) -> (i32, i32) {
    %c0_i32 = arith.constant 0 : i32
    %c0_i32_0 = arith.constant 0 : i32
    return %arg0, %c0_i32 : i32, i32
  }
  func.func @transform_1(%arg0: i32) -> (i32, i32) {
    %c0_i32 = arith.constant 0 : i32
    %c0_i32_0 = arith.constant 0 : i32
    %c0_i32_1 = arith.constant 0 : i32
    return %c0_i32, %c0_i32_0 : i32, i32
  }
  func.func @transform_2(%arg0: i32) -> (i32, i32) {
    %c0_i32 = arith.constant 0 : i32
    %c0_i32_0 = arith.constant 0 : i32
    %c0_i32_1 = arith.constant 0 : i32
    return %c0_i32, %c0_i32_0 : i32, i32
  }
  func.func @transform_3(%arg0: i32) -> (i32, i32) {
    %c0_i32 = arith.constant 0 : i32
    %c0_i32_0 = arith.constant 0 : i32
    %c0_i32_1 = arith.constant 0 : i32
    return %c0_i32, %c0_i32_0 : i32, i32
  }
  func.func @transform_4(%arg0: i32) -> (i32, i32) {
    %c0_i32 = arith.constant 0 : i32
    %c0_i32_0 = arith.constant 0 : i32
    %c0_i32_1 = arith.constant 0 : i32
    return %c0_i32, %c0_i32_0 : i32, i32
  }
  func.func @transform_5(%arg0: i32) -> (i32, i32) {
    %c0_i32 = arith.constant 0 : i32
    %c0_i32_0 = arith.constant 0 : i32
    %c0_i32_1 = arith.constant 0 : i32
    return %c0_i32, %c0_i32_0 : i32, i32
  }
  func.func @transform_6(%arg0: i32) -> (i32, i32) {
    %c0_i32 = arith.constant 0 : i32
    %c0_i32_0 = arith.constant 0 : i32
    %c0_i32_1 = arith.constant 0 : i32
    return %c0_i32, %c0_i32_0 : i32, i32
  }
  func.func @transform_7(%arg0: i32) -> (i32, i32, i32) {
    %c0_i32 = arith.constant 0 : i32
    %c0_i32_0 = arith.constant 0 : i32
    %c0_i32_1 = arith.constant 0 : i32
    return %arg0, %c0_i32, %c0_i32_0 : i32, i32, i32
  }
}

</mosaic_0001>

<llo_original>
// kernel: discriminator_forward.1
$region0: #{discriminator_forward.1}
  #allocation0 [shape = 'u32[]', space=smem, size = 0x4, offset = 0x4, fixed_abs, tag = 'smem constant byte address 0x4 - core index']
  #allocation1 [shape = 'u32[144,128]{1,0:T(1,128)}', space=vmem, size = 0x12000, scoped, tag = 'internal scratch']
  %s0 = inlined_call_operand.vmem [shape: f32[128,512], index: 0, kind: input, shape index: {}]
  %s1 = inlined_call_operand.hbm [shape: bf16[512,512], index: 1, kind: input, shape index: {}]
  %s2 = inlined_call_operand.vmem [shape: f32[1,512], index: 2, kind: input, shape index: {}]
  %s3 = inlined_call_operand.vmem [shape: bf16[512,256], index: 3, kind: input, shape index: {}]
  %s4 = inlined_call_operand.vmem [shape: f32[1,256], index: 4, kind: input, shape index: {}]
  %s5 = inlined_call_operand.vmem [shape: bf16[256,128], index: 5, kind: input, shape index: {}]
  %s6 = inlined_call_operand.vmem [shape: f32[1,128], index: 6, kind: input, shape index: {}]
  %s7 = inlined_call_operand.vmem [shape: f32[1,1,128], index: 7, kind: output, shape index: {}]
  %s8 = sld [smem:[#allocation0]]
  $region42: #{discriminator_forward.1} parent=0
    _
  %s10 = ssub.s32 1, %s8
  %s11 = scalar_select 0, %s10, %s8
  $region1: #{discriminator_forward.1} parent=0
    #allocation2 [shape = 'u8[524288]{0}', space=vmem, size = 0x80000, scoped, tag = 'input window, operand 1, single buffered']
    #allocation3 [shape = 's32[1]{0}', space=sflag, size = 0x4, scoped, tag = 'scoped memory for discriminator_forward.1']
    %12 = vsyncpa [#allocation3], 0
    // Predicated region
    $region2: #{discriminator_forward.1} parent=1 // pred_check
      _
    $region3: #{discriminator_forward.1} parent=1 // pred_check_branch
      %14 = sbr.rel (0) target = $region5
    $region4: #{discriminator_forward.1} parent=1 // pred_region
      _
    $region5: #{discriminator_forward.1} parent=1 // pred_fallthru
      _
    // Predicated region
    $region6: #{discriminator_forward.1} parent=1 // pred_check
      _
    $region7: #{discriminator_forward.1} parent=1 // pred_check_branch
      %16 = sbr.rel (0) target = $region9
    $region8: #{discriminator_forward.1} parent=1 // pred_region
      %s18 = ssub.s32 16384, 16384
      %19 = vsyncadd [#allocation3], %s18
      %s20 = sshll.u32 [#allocation2], 4
      %s21 = int_to_ptr.vmem [resolvable:$true] %s20
      %26 = dma.hbm_to_vmem [thread:$0]  %s1, 16384, %s21, [#allocation3], 256, 256, 16
    $region9: #{discriminator_forward.1} parent=1 // pred_fallthru
      _
    // Predicated region
    $region10: #{discriminator_forward.1} parent=1 // pred_check
      _
    $region11: #{discriminator_forward.1} parent=1 // pred_check_branch
      %28 = sbr.rel (0) target = $region13
    $region12: #{discriminator_forward.1} parent=1 // pred_region
      _
    $region13: #{discriminator_forward.1} parent=1 // pred_fallthru
      _
    // Predicated region
    $region14: #{discriminator_forward.1} parent=1 // pred_check
      _
    $region15: #{discriminator_forward.1} parent=1 // pred_check_branch
      %30 = sbr.rel (0) target = $region17
    $region16: #{discriminator_forward.1} parent=1 // pred_region
      _
    $region17: #{discriminator_forward.1} parent=1 // pred_fallthru
      _
    // Predicated region
    $region18: #{discriminator_forward.1} parent=1 // pred_check
      _
    $region19: #{discriminator_forward.1} parent=1 // pred_check_branch
      %32 = sbr.rel (0) target = $region21
    $region20: #{discriminator_forward.1} parent=1 // pred_region
      _
    $region21: #{discriminator_forward.1} parent=1 // pred_fallthru
      _
    // Predicated region
    $region22: #{discriminator_forward.1} parent=1 // pred_check
      _
    $region23: #{discriminator_forward.1} parent=1 // pred_check_branch
      %34 = sbr.rel (0) target = $region25
    $region24: #{discriminator_forward.1} parent=1 // pred_region
      _
    $region25: #{discriminator_forward.1} parent=1 // pred_fallthru
      _
    // Predicated region
    $region26: #{discriminator_forward.1} parent=1 // pred_check
      _
    $region27: #{discriminator_forward.1} parent=1 // pred_check_branch
      %36 = sbr.rel (0) target = $region29
    $region28: #{discriminator_forward.1} parent=1 // pred_region
      _
    $region29: #{discriminator_forward.1} parent=1 // pred_fallthru
      _
    // Predicated region
    $region30: #{discriminator_forward.1} parent=1 // pred_check
      _
    $region31: #{discriminator_forward.1} parent=1 // pred_check_branch
      %38 = sbr.rel (0) target = $region33
    $region32: #{discriminator_forward.1} parent=1 // pred_region
      %39 = dma.done [#allocation3], 16384
    $region33: #{discriminator_forward.1} parent=1 // pred_fallthru
      _
    %v41 = vld [vmem:[%s0] sm:$0xff]
    %v42 = vld [vmem:[%s0 + $0x8] sm:$0xff]
    %v43 = vld [vmem:[%s0 + $0x10] sm:$0xff]
    %v44 = vld [vmem:[%s0 + $0x18] sm:$0xff]
    %v45 = vld [vmem:[%s0 + $0x20] sm:$0xff]
    %v46 = vld [vmem:[%s0 + $0x28] sm:$0xff]
    %v47 = vld [vmem:[%s0 + $0x30] sm:$0xff]
    %v48 = vld [vmem:[%s0 + $0x38] sm:$0xff]
    %v49 = vld [vmem:[%s0 + $0x40] sm:$0xff]
    %v50 = vld [vmem:[%s0 + $0x48] sm:$0xff]
    %v51 = vld [vmem:[%s0 + $0x50] sm:$0xff]
    %v52 = vld [vmem:[%s0 + $0x58] sm:$0xff]
    %v53 = vld [vmem:[%s0 + $0x60] sm:$0xff]
    %v54 = vld [vmem:[%s0 + $0x68] sm:$0xff]
    %v55 = vld [vmem:[%s0 + $0x70] sm:$0xff]
    %v56 = vld [vmem:[%s0 + $0x78] sm:$0xff]
    %v57 = vld [vmem:[%s0 + $0x80] sm:$0xff]
    %v58 = vld [vmem:[%s0 + $0x88] sm:$0xff]
    %v59 = vld [vmem:[%s0 + $0x90] sm:$0xff]
    %v60 = vld [vmem:[%s0 + $0x98] sm:$0xff]
    %v61 = vld [vmem:[%s0 + $0xa0] sm:$0xff]
    %v62 = vld [vmem:[%s0 + $0xa8] sm:$0xff]
    %v63 = vld [vmem:[%s0 + $0xb0] sm:$0xff]
    %v64 = vld [vmem:[%s0 + $0xb8] sm:$0xff]
    %v65 = vld [vmem:[%s0 + $0xc0] sm:$0xff]
    %v66 = vld [vmem:[%s0 + $0xc8] sm:$0xff]
    %v67 = vld [vmem:[%s0 + $0xd0] sm:$0xff]
    %v68 = vld [vmem:[%s0 + $0xd8] sm:$0xff]
    %v69 = vld [vmem:[%s0 + $0xe0] sm:$0xff]
    %v70 = vld [vmem:[%s0 + $0xe8] sm:$0xff]
    %v71 = vld [vmem:[%s0 + $0xf0] sm:$0xff]
    %v72 = vld [vmem:[%s0 + $0xf8] sm:$0xff]
    %v73 = vld [vmem:[%s0 + $0x100] sm:$0xff]
    %v74 = vld [vmem:[%s0 + $0x108] sm:$0xff]
    %v75 = vld [vmem:[%s0 + $0x110] sm:$0xff]
    %v76 = vld [vmem:[%s0 + $0x118] sm:$0xff]
    %v77 = vld [vmem:[%s0 + $0x120] sm:$0xff]
    %v78 = vld [vmem:[%s0 + $0x128] sm:$0xff]
    %v79 = vld [vmem:[%s0 + $0x130] sm:$0xff]
    %v80 = vld [vmem:[%s0 + $0x138] sm:$0xff]
    %v81 = vld [vmem:[%s0 + $0x140] sm:$0xff]
    %v82 = vld [vmem:[%s0 + $0x148] sm:$0xff]
    %v83 = vld [vmem:[%s0 + $0x150] sm:$0xff]
    %v84 = vld [vmem:[%s0 + $0x158] sm:$0xff]
    %v85 = vld [vmem:[%s0 + $0x160] sm:$0xff]
    %v86 = vld [vmem:[%s0 + $0x168] sm:$0xff]
    %v87 = vld [vmem:[%s0 + $0x170] sm:$0xff]
    %v88 = vld [vmem:[%s0 + $0x178] sm:$0xff]
    %v89 = vld [vmem:[%s0 + $0x180] sm:$0xff]
    %v90 = vld [vmem:[%s0 + $0x188] sm:$0xff]
    %v91 = vld [vmem:[%s0 + $0x190] sm:$0xff]
    %v92 = vld [vmem:[%s0 + $0x198] sm:$0xff]
    %v93 = vld [vmem:[%s0 + $0x1a0] sm:$0xff]
    %v94 = vld [vmem:[%s0 + $0x1a8] sm:$0xff]
    %v95 = vld [vmem:[%s0 + $0x1b0] sm:$0xff]
    %v96 = vld [vmem:[%s0 + $0x1b8] sm:$0xff]
    %v97 = vld [vmem:[%s0 + $0x1c0] sm:$0xff]
    %v98 = vld [vmem:[%s0 + $0x1c8] sm:$0xff]
    %v99 = vld [vmem:[%s0 + $0x1d0] sm:$0xff]
    %v100 = vld [vmem:[%s0 + $0x1d8] sm:$0xff]
    %v101 = vld [vmem:[%s0 + $0x1e0] sm:$0xff]
    %v102 = vld [vmem:[%s0 + $0x1e8] sm:$0xff]
    %v103 = vld [vmem:[%s0 + $0x1f0] sm:$0xff]
    %v104 = vld [vmem:[%s0 + $0x1f8] sm:$0xff]
    %v105 = vpack.c.bf16 %v45, %v41
    %v106 = vpack.c.bf16 %v46, %v42
    %v107 = vpack.c.bf16 %v47, %v43
    %v108 = vpack.c.bf16 %v48, %v44
    %v109 = vpack.c.bf16 %v53, %v49
    %v110 = vpack.c.bf16 %v54, %v50
    %v111 = vpack.c.bf16 %v55, %v51
    %v112 = vpack.c.bf16 %v56, %v52
    %v113 = vpack.c.bf16 %v61, %v57
    %v114 = vpack.c.bf16 %v62, %v58
    %v115 = vpack.c.bf16 %v63, %v59
    %v116 = vpack.c.bf16 %v64, %v60
    %v117 = vpack.c.bf16 %v69, %v65
    %v118 = vpack.c.bf16 %v70, %v66
    %v119 = vpack.c.bf16 %v71, %v67
    %v120 = vpack.c.bf16 %v72, %v68
    %v121 = vpack.c.bf16 %v77, %v73
    %v122 = vpack.c.bf16 %v78, %v74
    %v123 = vpack.c.bf16 %v79, %v75
    %v124 = vpack.c.bf16 %v80, %v76
    %v125 = vpack.c.bf16 %v85, %v81
    %v126 = vpack.c.bf16 %v86, %v82
    %v127 = vpack.c.bf16 %v87, %v83
    %v128 = vpack.c.bf16 %v88, %v84
    %v129 = vpack.c.bf16 %v93, %v89
    %v130 = vpack.c.bf16 %v94, %v90
    %v131 = vpack.c.bf16 %v95, %v91
    %v132 = vpack.c.bf16 %v96, %v92
    %v133 = vpack.c.bf16 %v101, %v97
    %v134 = vpack.c.bf16 %v102, %v98
    %v135 = vpack.c.bf16 %v103, %v99
    %v136 = vpack.c.bf16 %v104, %v100
    %v137 = vld [vmem:[#allocation2] sm:$0xff]
    %v138 = vld [vmem:[#allocation2 + $0x8] sm:$0xff]
    %v139 = vld [vmem:[#allocation2 + $0x10] sm:$0xff]
    %v140 = vld [vmem:[#allocation2 + $0x18] sm:$0xff]
    %v141 = vld [vmem:[#allocation2 + $0x20] sm:$0xff]
    %v142 = vld [vmem:[#allocation2 + $0x28] sm:$0xff]
    %v143 = vld [vmem:[#allocation2 + $0x30] sm:$0xff]
    %v144 = vld [vmem:[#allocation2 + $0x38] sm:$0xff]
    %v145 = vld [vmem:[#allocation2 + $0x40] sm:$0xff]
    %v146 = vld [vmem:[#allocation2 + $0x48] sm:$0xff]
    %v147 = vld [vmem:[#allocation2 + $0x50] sm:$0xff]
    %v148 = vld [vmem:[#allocation2 + $0x58] sm:$0xff]
    %v149 = vld [vmem:[#allocation2 + $0x60] sm:$0xff]
    %v150 = vld [vmem:[#allocation2 + $0x68] sm:$0xff]
    %v151 = vld [vmem:[#allocation2 + $0x70] sm:$0xff]
    %v152 = vld [vmem:[#allocation2 + $0x78] sm:$0xff]
    %v153 = vld [vmem:[#allocation2 + $0x80] sm:$0xff]
    %v154 = vld [vmem:[#allocation2 + $0x88] sm:$0xff]
    %v155 = vld [vmem:[#allocation2 + $0x90] sm:$0xff]
    %v156 = vld [vmem:[#allocation2 + $0x98] sm:$0xff]
    %v157 = vld [vmem:[#allocation2 + $0xa0] sm:$0xff]
    %v158 = vld [vmem:[#allocation2 + $0xa8] sm:$0xff]
    %v159 = vld [vmem:[#allocation2 + $0xb0] sm:$0xff]
    %v160 = vld [vmem:[#allocation2 + $0xb8] sm:$0xff]
    %v161 = vld [vmem:[#allocation2 + $0xc0] sm:$0xff]
    %v162 = vld [vmem:[#allocation2 + $0xc8] sm:$0xff]
    %v163 = vld [vmem:[#allocation2 + $0xd0] sm:$0xff]
    %v164 = vld [vmem:[#allocation2 + $0xd8] sm:$0xff]
    %v165 = vld [vmem:[#allocation2 + $0xe0] sm:$0xff]
    %v166 = vld [vmem:[#allocation2 + $0xe8] sm:$0xff]
    %v167 = vld [vmem:[#allocation2 + $0xf0] sm:$0xff]
    %v168 = vld [vmem:[#allocation2 + $0xf8] sm:$0xff]
    %v169 = vld [vmem:[#allocation2 + $0x100] sm:$0xff]
    %v170 = vld [vmem:[#allocation2 + $0x108] sm:$0xff]
    %v171 = vld [vmem:[#allocation2 + $0x110] sm:$0xff]
    %v172 = vld [vmem:[#allocation2 + $0x118] sm:$0xff]
    %v173 = vld [vmem:[#allocation2 + $0x120] sm:$0xff]
    %v174 = vld [vmem:[#allocation2 + $0x128] sm:$0xff]
    %v175 = vld [vmem:[#allocation2 + $0x130] sm:$0xff]
    %v176 = vld [vmem:[#allocation2 + $0x138] sm:$0xff]
    %v177 = vld [vmem:[#allocation2 + $0x140] sm:$0xff]
    %v178 = vld [vmem:[#allocation2 + $0x148] sm:$0xff]
    %v179 = vld [vmem:[#allocation2 + $0x150] sm:$0xff]
    %v180 = vld [vmem:[#allocation2 + $0x158] sm:$0xff]
    %v181 = vld [vmem:[#allocation2 + $0x160] sm:$0xff]
    %v182 = vld [vmem:[#allocation2 + $0x168] sm:$0xff]
    %v183 = vld [vmem:[#allocation2 + $0x170] sm:$0xff]
    %v184 = vld [vmem:[#allocation2 + $0x178] sm:$0xff]
    %v185 = vld [vmem:[#allocation2 + $0x180] sm:$0xff]
    %v186 = vld [vmem:[#allocation2 + $0x188] sm:$0xff]
    %v187 = vld [vmem:[#allocation2 + $0x190] sm:$0xff]
    %v188 = vld [vmem:[#allocation2 + $0x198] sm:$0xff]
    %v189 = vld [vmem:[#allocation2 + $0x1a0] sm:$0xff]
    %v190 = vld [vmem:[#allocation2 + $0x1a8] sm:$0xff]
    %v191 = vld [vmem:[#allocation2 + $0x1b0] sm:$0xff]
    %v192 = vld [vmem:[#allocation2 + $0x1b8] sm:$0xff]
    %v193 = vld [vmem:[#allocation2 + $0x1c0] sm:$0xff]
    %v194 = vld [vmem:[#allocation2 + $0x1c8] sm:$0xff]
    %v195 = vld [vmem:[#allocation2 + $0x1d0] sm:$0xff]
    %v196 = vld [vmem:[#allocation2 + $0x1d8] sm:$0xff]
    %v197 = vld [vmem:[#allocation2 + $0x1e0] sm:$0xff]
    %v198 = vld [vmem:[#allocation2 + $0x1e8] sm:$0xff]
    %v199 = vld [vmem:[#allocation2 + $0x1f0] sm:$0xff]
    %v200 = vld [vmem:[#allocation2 + $0x1f8] sm:$0xff]
    %v201 = vld [vmem:[#allocation2 + $0x200] sm:$0xff]
    %v202 = vld [vmem:[#allocation2 + $0x208] sm:$0xff]
    %v203 = vld [vmem:[#allocation2 + $0x210] sm:$0xff]
    %v204 = vld [vmem:[#allocation2 + $0x218] sm:$0xff]
    %v205 = vld [vmem:[#allocation2 + $0x220] sm:$0xff]
    %v206 = vld [vmem:[#allocation2 + $0x228] sm:$0xff]
    %v207 = vld [vmem:[#allocation2 + $0x230] sm:$0xff]
    %v208 = vld [vmem:[#allocation2 + $0x238] sm:$0xff]
    %v209 = vld [vmem:[#allocation2 + $0x240] sm:$0xff]
    %v210 = vld [vmem:[#allocation2 + $0x248] sm:$0xff]
    %v211 = vld [vmem:[#allocation2 + $0x250] sm:$0xff]
    %v212 = vld [vmem:[#allocation2 + $0x258] sm:$0xff]
    %v213 = vld [vmem:[#allocation2 + $0x260] sm:$0xff]
    %v214 = vld [vmem:[#allocation2 + $0x268] sm:$0xff]
    %v215 = vld [vmem:[#allocation2 + $0x270] sm:$0xff]
    %v216 = vld [vmem:[#allocation2 + $0x278] sm:$0xff]
    %v217 = vld [vmem:[#allocation2 + $0x280] sm:$0xff]
    %v218 = vld [vmem:[#allocation2 + $0x288] sm:$0xff]
    %v219 = vld [vmem:[#allocation2 + $0x290] sm:$0xff]
    %v220 = vld [vmem:[#allocation2 + $0x298] sm:$0xff]
    %v221 = vld [vmem:[#allocation2 + $0x2a0] sm:$0xff]
    %v222 = vld [vmem:[#allocation2 + $0x2a8] sm:$0xff]
    %v223 = vld [vmem:[#allocation2 + $0x2b0] sm:$0xff]
    %v224 = vld [vmem:[#allocation2 + $0x2b8] sm:$0xff]
    %v225 = vld [vmem:[#allocation2 + $0x2c0] sm:$0xff]
    %v226 = vld [vmem:[#allocation2 + $0x2c8] sm:$0xff]
    %v227 = vld [vmem:[#allocation2 + $0x2d0] sm:$0xff]
    %v228 = vld [vmem:[#allocation2 + $0x2d8] sm:$0xff]
    %v229 = vld [vmem:[#allocation2 + $0x2e0] sm:$0xff]
    %v230 = vld [vmem:[#allocation2 + $0x2e8] sm:$0xff]
    %v231 = vld [vmem:[#allocation2 + $0x2f0] sm:$0xff]
    %v232 = vld [vmem:[#allocation2 + $0x2f8] sm:$0xff]
    %v233 = vld [vmem:[#allocation2 + $0x300] sm:$0xff]
    %v234 = vld [vmem:[#allocation2 + $0x308] sm:$0xff]
    %v235 = vld [vmem:[#allocation2 + $0x310] sm:$0xff]
    %v236 = vld [vmem:[#allocation2 + $0x318] sm:$0xff]
    %v237 = vld [vmem:[#allocation2 + $0x320] sm:$0xff]
    %v238 = vld [vmem:[#allocation2 + $0x328] sm:$0xff]
    %v239 = vld [vmem:[#allocation2 + $0x330] sm:$0xff]
    %v240 = vld [vmem:[#allocation2 + $0x338] sm:$0xff]
    %v241 = vld [vmem:[#allocation2 + $0x340] sm:$0xff]
    %v242 = vld [vmem:[#allocation2 + $0x348] sm:$0xff]
    %v243 = vld [vmem:[#allocation2 + $0x350] sm:$0xff]
    %v244 = vld [vmem:[#allocation2 + $0x358] sm:$0xff]
    %v245 = vld [vmem:[#allocation2 + $0x360] sm:$0xff]
    %v246 = vld [vmem:[#allocation2 + $0x368] sm:$0xff]
    %v247 = vld [vmem:[#allocation2 + $0x370] sm:$0xff]
    %v248 = vld [vmem:[#allocation2 + $0x378] sm:$0xff]
    %v249 = vld [vmem:[#allocation2 + $0x380] sm:$0xff]
    %v250 = vld [vmem:[#allocation2 + $0x388] sm:$0xff]
    %v251 = vld [vmem:[#allocation2 + $0x390] sm:$0xff]
    %v252 = vld [vmem:[#allocation2 + $0x398] sm:$0xff]
    %v253 = vld [vmem:[#allocation2 + $0x3a0] sm:$0xff]
    %v254 = vld [vmem:[#allocation2 + $0x3a8] sm:$0xff]
    %v255 = vld [vmem:[#allocation2 + $0x3b0] sm:$0xff]
    %v256 = vld [vmem:[#allocation2 + $0x3b8] sm:$0xff]
    %v257 = vld [vmem:[#allocation2 + $0x3c0] sm:$0xff]
    %v258 = vld [vmem:[#allocation2 + $0x3c8] sm:$0xff]
    %v259 = vld [vmem:[#allocation2 + $0x3d0] sm:$0xff]
    %v260 = vld [vmem:[#allocation2 + $0x3d8] sm:$0xff]
    %v261 = vld [vmem:[#allocation2 + $0x3e0] sm:$0xff]
    %v262 = vld [vmem:[#allocation2 + $0x3e8] sm:$0xff]
    %v263 = vld [vmem:[#allocation2 + $0x3f0] sm:$0xff]
    %v264 = vld [vmem:[#allocation2 + $0x3f8] sm:$0xff]
    %v265 = vld [vmem:[%s2] sm:$0xf]
    %v267 = vlaneseq
    %v268 = vshrl.u32 %v267, 7
    %v269 = vsub.s32 0, %v268
    %v270 = vrot.slane %v265, %v269
    %v271 = vlaneseq
    %v272 = vshrl.u32 %v271, 7
    %v273 = vsub.s32 1, %v272
    %v274 = vrot.slane %v265, %v273
    %v275 = vlaneseq
    %v276 = vshrl.u32 %v275, 7
    %v277 = vsub.s32 2, %v276
    %v278 = vrot.slane %v265, %v277
    %v279 = vlaneseq
    %v280 = vshrl.u32 %v279, 7
    %v281 = vsub.s32 3, %v280
    %v282 = vrot.slane %v265, %v281
    %v415 = vunpack.c.l.b16 %v137
    %v416 = vunpack.c.h.b16 %v137
    %v417 = vunpack.c.l.b16 %v138
    %v418 = vunpack.c.h.b16 %v138
    %v419 = vunpack.c.l.b16 %v139
    %v420 = vunpack.c.h.b16 %v139
    %v421 = vunpack.c.l.b16 %v140
    %v422 = vunpack.c.h.b16 %v140
    %v423 = vunpack.c.l.b16 %v141
    %v424 = vunpack.c.h.b16 %v141
    %v425 = vunpack.c.l.b16 %v142
    %v426 = vunpack.c.h.b16 %v142
    %v427 = vunpack.c.l.b16 %v143
    %v428 = vunpack.c.h.b16 %v143
    %v429 = vunpack.c.l.b16 %v144
    %v430 = vunpack.c.h.b16 %v144
    %v431 = vunpack.c.l.b16 %v145
    %v432 = vunpack.c.h.b16 %v145
    %v433 = vunpack.c.l.b16 %v146
    %v434 = vunpack.c.h.b16 %v146
    %v435 = vunpack.c.l.b16 %v147
    %v436 = vunpack.c.h.b16 %v147
    %v437 = vunpack.c.l.b16 %v148
    %v438 = vunpack.c.h.b16 %v148
    %v439 = vunpack.c.l.b16 %v149
    %v440 = vunpack.c.h.b16 %v149
    %v441 = vunpack.c.l.b16 %v150
    %v442 = vunpack.c.h.b16 %v150
    %v443 = vunpack.c.l.b16 %v151
    %v444 = vunpack.c.h.b16 %v151
    %v445 = vunpack.c.l.b16 %v152
    %v446 = vunpack.c.h.b16 %v152
    %v447 = vunpack.c.l.b16 %v153
    %v448 = vunpack.c.h.b16 %v153
    %v449 = vunpack.c.l.b16 %v154
    %v450 = vunpack.c.h.b16 %v154
    %v451 = vunpack.c.l.b16 %v155
    %v452 = vunpack.c.h.b16 %v155
    %v453 = vunpack.c.l.b16 %v156
    %v454 = vunpack.c.h.b16 %v156
    %v455 = vunpack.c.l.b16 %v157
    %v456 = vunpack.c.h.b16 %v157
    %v457 = vunpack.c.l.b16 %v158
    %v458 = vunpack.c.h.b16 %v158
    %v459 = vunpack.c.l.b16 %v159
    %v460 = vunpack.c.h.b16 %v159
    %v461 = vunpack.c.l.b16 %v160
    %v462 = vunpack.c.h.b16 %v160
    %v463 = vunpack.c.l.b16 %v161
    %v464 = vunpack.c.h.b16 %v161
    %v465 = vunpack.c.l.b16 %v162
    %v466 = vunpack.c.h.b16 %v162
    %v467 = vunpack.c.l.b16 %v163
    %v468 = vunpack.c.h.b16 %v163
    %v469 = vunpack.c.l.b16 %v164
    %v470 = vunpack.c.h.b16 %v164
    %v471 = vunpack.c.l.b16 %v165
    %v472 = vunpack.c.h.b16 %v165
    %v473 = vunpack.c.l.b16 %v166
    %v474 = vunpack.c.h.b16 %v166
    %v475 = vunpack.c.l.b16 %v167
    %v476 = vunpack.c.h.b16 %v167
    %v477 = vunpack.c.l.b16 %v168
    %v478 = vunpack.c.h.b16 %v168
    %v479 = vunpack.c.l.b16 %v169
    %v480 = vunpack.c.h.b16 %v169
    %v481 = vunpack.c.l.b16 %v170
    %v482 = vunpack.c.h.b16 %v170
    %v483 = vunpack.c.l.b16 %v171
    %v484 = vunpack.c.h.b16 %v171
    %v485 = vunpack.c.l.b16 %v172
    %v486 = vunpack.c.h.b16 %v172
    %v487 = vunpack.c.l.b16 %v173
    %v488 = vunpack.c.h.b16 %v173
    %v489 = vunpack.c.l.b16 %v174
    %v490 = vunpack.c.h.b16 %v174
    %v491 = vunpack.c.l.b16 %v175
    %v492 = vunpack.c.h.b16 %v175
    %v493 = vunpack.c.l.b16 %v176
    %v494 = vunpack.c.h.b16 %v176
    %v495 = vunpack.c.l.b16 %v177
    %v496 = vunpack.c.h.b16 %v177
    %v497 = vunpack.c.l.b16 %v178
    %v498 = vunpack.c.h.b16 %v178
    %v499 = vunpack.c.l.b16 %v179
    %v500 = vunpack.c.h.b16 %v179
    %v501 = vunpack.c.l.b16 %v180
    %v502 = vunpack.c.h.b16 %v180
    %v503 = vunpack.c.l.b16 %v181
    %v504 = vunpack.c.h.b16 %v181
    %v505 = vunpack.c.l.b16 %v182
    %v506 = vunpack.c.h.b16 %v182
    %v507 = vunpack.c.l.b16 %v183
    %v508 = vunpack.c.h.b16 %v183
    %v509 = vunpack.c.l.b16 %v184
    %v510 = vunpack.c.h.b16 %v184
    %v511 = vunpack.c.l.b16 %v185
    %v512 = vunpack.c.h.b16 %v185
    %v513 = vunpack.c.l.b16 %v186
    %v514 = vunpack.c.h.b16 %v186
    %v515 = vunpack.c.l.b16 %v187
    %v516 = vunpack.c.h.b16 %v187
    %v517 = vunpack.c.l.b16 %v188
    %v518 = vunpack.c.h.b16 %v188
    %v519 = vunpack.c.l.b16 %v189
    %v520 = vunpack.c.h.b16 %v189
    %v521 = vunpack.c.l.b16 %v190
    %v522 = vunpack.c.h.b16 %v190
    %v523 = vunpack.c.l.b16 %v191
    %v524 = vunpack.c.h.b16 %v191
    %v525 = vunpack.c.l.b16 %v192
    %v526 = vunpack.c.h.b16 %v192
    %v527 = vunpack.c.l.b16 %v193
    %v528 = vunpack.c.h.b16 %v193
    %v529 = vunpack.c.l.b16 %v194
    %v530 = vunpack.c.h.b16 %v194
    %v531 = vunpack.c.l.b16 %v195
    %v532 = vunpack.c.h.b16 %v195
    %v533 = vunpack.c.l.b16 %v196
    %v534 = vunpack.c.h.b16 %v196
    %v535 = vunpack.c.l.b16 %v197
    %v536 = vunpack.c.h.b16 %v197
    %v537 = vunpack.c.l.b16 %v198
    %v538 = vunpack.c.h.b16 %v198
    %v539 = vunpack.c.l.b16 %v199
    %v540 = vunpack.c.h.b16 %v199
    %v541 = vunpack.c.l.b16 %v200
    %v542 = vunpack.c.h.b16 %v200
    %v543 = vunpack.c.l.b16 %v201
    %v544 = vunpack.c.h.b16 %v201
    %v545 = vunpack.c.l.b16 %v202
    %v546 = vunpack.c.h.b16 %v202
    %v547 = vunpack.c.l.b16 %v203
    %v548 = vunpack.c.h.b16 %v203
    %v549 = vunpack.c.l.b16 %v204
    %v550 = vunpack.c.h.b16 %v204
    %v551 = vunpack.c.l.b16 %v205
    %v552 = vunpack.c.h.b16 %v205
    %v553 = vunpack.c.l.b16 %v206
    %v554 = vunpack.c.h.b16 %v206
    %v555 = vunpack.c.l.b16 %v207
    %v556 = vunpack.c.h.b16 %v207
    %v557 = vunpack.c.l.b16 %v208
    %v558 = vunpack.c.h.b16 %v208
    %v559 = vunpack.c.l.b16 %v209
    %v560 = vunpack.c.h.b16 %v209
    %v561 = vunpack.c.l.b16 %v210
    %v562 = vunpack.c.h.b16 %v210
    %v563 = vunpack.c.l.b16 %v211
    %v564 = vunpack.c.h.b16 %v211
    %v565 = vunpack.c.l.b16 %v212
    %v566 = vunpack.c.h.b16 %v212
    %v567 = vunpack.c.l.b16 %v213
    %v568 = vunpack.c.h.b16 %v213
    %v569 = vunpack.c.l.b16 %v214
    %v570 = vunpack.c.h.b16 %v214
    %v571 = vunpack.c.l.b16 %v215
    %v572 = vunpack.c.h.b16 %v215
    %v573 = vunpack.c.l.b16 %v216
    %v574 = vunpack.c.h.b16 %v216
    %v575 = vunpack.c.l.b16 %v217
    %v576 = vunpack.c.h.b16 %v217
    %v577 = vunpack.c.l.b16 %v218
    %v578 = vunpack.c.h.b16 %v218
    %v579 = vunpack.c.l.b16 %v219
    %v580 = vunpack.c.h.b16 %v219
    %v581 = vunpack.c.l.b16 %v220
    %v582 = vunpack.c.h.b16 %v220
    %v583 = vunpack.c.l.b16 %v221
    %v584 = vunpack.c.h.b16 %v221
    %v585 = vunpack.c.l.b16 %v222
    %v586 = vunpack.c.h.b16 %v222
    %v587 = vunpack.c.l.b16 %v223
    %v588 = vunpack.c.h.b16 %v223
    %v589 = vunpack.c.l.b16 %v224
    %v590 = vunpack.c.h.b16 %v224
    %v591 = vunpack.c.l.b16 %v225
    %v592 = vunpack.c.h.b16 %v225
    %v593 = vunpack.c.l.b16 %v226
    %v594 = vunpack.c.h.b16 %v226
    %v595 = vunpack.c.l.b16 %v227
    %v596 = vunpack.c.h.b16 %v227
    %v597 = vunpack.c.l.b16 %v228
    %v598 = vunpack.c.h.b16 %v228
    %v599 = vunpack.c.l.b16 %v229
    %v600 = vunpack.c.h.b16 %v229
    %v601 = vunpack.c.l.b16 %v230
    %v602 = vunpack.c.h.b16 %v230
    %v603 = vunpack.c.l.b16 %v231
    %v604 = vunpack.c.h.b16 %v231
    %v605 = vunpack.c.l.b16 %v232
    %v606 = vunpack.c.h.b16 %v232
    %v607 = vunpack.c.l.b16 %v233
    %v608 = vunpack.c.h.b16 %v233
    %v609 = vunpack.c.l.b16 %v234
    %v610 = vunpack.c.h.b16 %v234
    %v611 = vunpack.c.l.b16 %v235
    %v612 = vunpack.c.h.b16 %v235
    %v613 = vunpack.c.l.b16 %v236
    %v614 = vunpack.c.h.b16 %v236
    %v615 = vunpack.c.l.b16 %v237
    %v616 = vunpack.c.h.b16 %v237
    %v617 = vunpack.c.l.b16 %v238
    %v618 = vunpack.c.h.b16 %v238
    %v619 = vunpack.c.l.b16 %v239
    %v620 = vunpack.c.h.b16 %v239
    %v621 = vunpack.c.l.b16 %v240
    %v622 = vunpack.c.h.b16 %v240
    %v623 = vunpack.c.l.b16 %v241
    %v624 = vunpack.c.h.b16 %v241
    %v625 = vunpack.c.l.b16 %v242
    %v626 = vunpack.c.h.b16 %v242
    %v627 = vunpack.c.l.b16 %v243
    %v628 = vunpack.c.h.b16 %v243
    %v629 = vunpack.c.l.b16 %v244
    %v630 = vunpack.c.h.b16 %v244
    %v631 = vunpack.c.l.b16 %v245
    %v632 = vunpack.c.h.b16 %v245
    %v633 = vunpack.c.l.b16 %v246
    %v634 = vunpack.c.h.b16 %v246
    %v635 = vunpack.c.l.b16 %v247
    %v636 = vunpack.c.h.b16 %v247
    %v637 = vunpack.c.l.b16 %v248
    %v638 = vunpack.c.h.b16 %v248
    %v639 = vunpack.c.l.b16 %v249
    %v640 = vunpack.c.h.b16 %v249
    %v641 = vunpack.c.l.b16 %v250
    %v642 = vunpack.c.h.b16 %v250
    %v643 = vunpack.c.l.b16 %v251
    %v644 = vunpack.c.h.b16 %v251
    %v645 = vunpack.c.l.b16 %v252
    %v646 = vunpack.c.h.b16 %v252
    %v647 = vunpack.c.l.b16 %v253
    %v648 = vunpack.c.h.b16 %v253
    %v649 = vunpack.c.l.b16 %v254
    %v650 = vunpack.c.h.b16 %v254
    %v651 = vunpack.c.l.b16 %v255
    %v652 = vunpack.c.h.b16 %v255
    %v653 = vunpack.c.l.b16 %v256
    %v654 = vunpack.c.h.b16 %v256
    %v655 = vunpack.c.l.b16 %v257
    %v656 = vunpack.c.h.b16 %v257
    %v657 = vunpack.c.l.b16 %v258
    %v658 = vunpack.c.h.b16 %v258
    %v659 = vunpack.c.l.b16 %v259
    %v660 = vunpack.c.h.b16 %v259
    %v661 = vunpack.c.l.b16 %v260
    %v662 = vunpack.c.h.b16 %v260
    %v663 = vunpack.c.l.b16 %v261
    %v664 = vunpack.c.h.b16 %v261
    %v665 = vunpack.c.l.b16 %v262
    %v666 = vunpack.c.h.b16 %v262
    %v667 = vunpack.c.l.b16 %v263
    %v668 = vunpack.c.h.b16 %v263
    %v669 = vunpack.c.l.b16 %v264
    %v670 = vunpack.c.h.b16 %v264
    %v671 = vpack.c.b16 %v419, %v415
    %v672 = vpack.c.b16 %v420, %v416
    %v673 = vpack.c.b16 %v421, %v417
    %v674 = vpack.c.b16 %v422, %v418
    %v675 = vpack.c.b16 %v427, %v423
    %v676 = vpack.c.b16 %v428, %v424
    %v677 = vpack.c.b16 %v429, %v425
    %v678 = vpack.c.b16 %v430, %v426
    %v679 = vpack.c.b16 %v435, %v431
    %v680 = vpack.c.b16 %v436, %v432
    %v681 = vpack.c.b16 %v437, %v433
    %v682 = vpack.c.b16 %v438, %v434
    %v683 = vpack.c.b16 %v443, %v439
    %v684 = vpack.c.b16 %v444, %v440
    %v685 = vpack.c.b16 %v445, %v441
    %v686 = vpack.c.b16 %v446, %v442
    %v687 = vpack.c.b16 %v451, %v447
    %v688 = vpack.c.b16 %v452, %v448
    %v689 = vpack.c.b16 %v453, %v449
    %v690 = vpack.c.b16 %v454, %v450
    %v691 = vpack.c.b16 %v459, %v455
    %v692 = vpack.c.b16 %v460, %v456
    %v693 = vpack.c.b16 %v461, %v457
    %v694 = vpack.c.b16 %v462, %v458
    %v695 = vpack.c.b16 %v467, %v463
    %v696 = vpack.c.b16 %v468, %v464
    %v697 = vpack.c.b16 %v469, %v465
    %v698 = vpack.c.b16 %v470, %v466
    %v699 = vpack.c.b16 %v475, %v471
    %v700 = vpack.c.b16 %v476, %v472
    %v701 = vpack.c.b16 %v477, %v473
    %v702 = vpack.c.b16 %v478, %v474
    %v703 = vpack.c.b16 %v483, %v479
    %v704 = vpack.c.b16 %v484, %v480
    %v705 = vpack.c.b16 %v485, %v481
    %v706 = vpack.c.b16 %v486, %v482
    %v707 = vpack.c.b16 %v491, %v487
    %v708 = vpack.c.b16 %v492, %v488
    %v709 = vpack.c.b16 %v493, %v489
    %v710 = vpack.c.b16 %v494, %v490
    %v711 = vpack.c.b16 %v499, %v495
    %v712 = vpack.c.b16 %v500, %v496
    %v713 = vpack.c.b16 %v501, %v497
    %v714 = vpack.c.b16 %v502, %v498
    %v715 = vpack.c.b16 %v507, %v503
    %v716 = vpack.c.b16 %v508, %v504
    %v717 = vpack.c.b16 %v509, %v505
    %v718 = vpack.c.b16 %v510, %v506
    %v719 = vpack.c.b16 %v515, %v511
    %v720 = vpack.c.b16 %v516, %v512
    %v721 = vpack.c.b16 %v517, %v513
    %v722 = vpack.c.b16 %v518, %v514
    %v723 = vpack.c.b16 %v523, %v519
    %v724 = vpack.c.b16 %v524, %v520
    %v725 = vpack.c.b16 %v525, %v521
    %v726 = vpack.c.b16 %v526, %v522
    %v727 = vpack.c.b16 %v531, %v527
    %v728 = vpack.c.b16 %v532, %v528
    %v729 = vpack.c.b16 %v533, %v529
    %v730 = vpack.c.b16 %v534, %v530
    %v731 = vpack.c.b16 %v539, %v535
    %v732 = vpack.c.b16 %v540, %v536
    %v733 = vpack.c.b16 %v541, %v537
    %v734 = vpack.c.b16 %v542, %v538
    %v735 = vpack.c.b16 %v547, %v543
    %v736 = vpack.c.b16 %v548, %v544
    %v737 = vpack.c.b16 %v549, %v545
    %v738 = vpack.c.b16 %v550, %v546
    %v739 = vpack.c.b16 %v555, %v551
    %v740 = vpack.c.b16 %v556, %v552
    %v741 = vpack.c.b16 %v557, %v553
    %v742 = vpack.c.b16 %v558, %v554
    %v743 = vpack.c.b16 %v563, %v559
    %v744 = vpack.c.b16 %v564, %v560
    %v745 = vpack.c.b16 %v565, %v561
    %v746 = vpack.c.b16 %v566, %v562
    %v747 = vpack.c.b16 %v571, %v567
    %v748 = vpack.c.b16 %v572, %v568
    %v749 = vpack.c.b16 %v573, %v569
    %v750 = vpack.c.b16 %v574, %v570
    %v751 = vpack.c.b16 %v579, %v575
    %v752 = vpack.c.b16 %v580, %v576
    %v753 = vpack.c.b16 %v581, %v577
    %v754 = vpack.c.b16 %v582, %v578
    %v755 = vpack.c.b16 %v587, %v583
    %v756 = vpack.c.b16 %v588, %v584
    %v757 = vpack.c.b16 %v589, %v585
    %v758 = vpack.c.b16 %v590, %v586
    %v759 = vpack.c.b16 %v595, %v591
    %v760 = vpack.c.b16 %v596, %v592
    %v761 = vpack.c.b16 %v597, %v593
    %v762 = vpack.c.b16 %v598, %v594
    %v763 = vpack.c.b16 %v603, %v599
    %v764 = vpack.c.b16 %v604, %v600
    %v765 = vpack.c.b16 %v605, %v601
    %v766 = vpack.c.b16 %v606, %v602
    %v767 = vpack.c.b16 %v611, %v607
    %v768 = vpack.c.b16 %v612, %v608
    %v769 = vpack.c.b16 %v613, %v609
    %v770 = vpack.c.b16 %v614, %v610
    %v771 = vpack.c.b16 %v619, %v615
    %v772 = vpack.c.b16 %v620, %v616
    %v773 = vpack.c.b16 %v621, %v617
    %v774 = vpack.c.b16 %v622, %v618
    %v775 = vpack.c.b16 %v627, %v623
    %v776 = vpack.c.b16 %v628, %v624
    %v777 = vpack.c.b16 %v629, %v625
    %v778 = vpack.c.b16 %v630, %v626
    %v779 = vpack.c.b16 %v635, %v631
    %v780 = vpack.c.b16 %v636, %v632
    %v781 = vpack.c.b16 %v637, %v633
    %v782 = vpack.c.b16 %v638, %v634
    %v783 = vpack.c.b16 %v643, %v639
    %v784 = vpack.c.b16 %v644, %v640
    %v785 = vpack.c.b16 %v645, %v641
    %v786 = vpack.c.b16 %v646, %v642
    %v787 = vpack.c.b16 %v651, %v647
    %v788 = vpack.c.b16 %v652, %v648
    %v789 = vpack.c.b16 %v653, %v649
    %v790 = vpack.c.b16 %v654, %v650
    %v791 = vpack.c.b16 %v659, %v655
    %v792 = vpack.c.b16 %v660, %v656
    %v793 = vpack.c.b16 %v661, %v657
    %v794 = vpack.c.b16 %v662, %v658
    %v795 = vpack.c.b16 %v667, %v663
    %v796 = vpack.c.b16 %v668, %v664
    %v797 = vpack.c.b16 %v669, %v665
    %v798 = vpack.c.b16 %v670, %v666
    %927 = vmatprep.subr.bf16.mxu0 %v672
    %928 = vmatpush1.bf16.msra.mxu0 %v671
    %929 = vmatprep.subr.bf16.mxu0 %v676
    %930 = vmatpush1.bf16.msra.mxu0 %v675
    %931 = vmatprep.subr.bf16.mxu0 %v680
    %932 = vmatpush1.bf16.msra.mxu0 %v679
    %933 = vmatprep.subr.bf16.mxu0 %v684
    %934 = vmatpush1.bf16.msra.mxu0 %v683
    %935 = vmatprep.subr.bf16.mxu0 %v688
    %936 = vmatpush1.bf16.msra.mxu0 %v687
    %937 = vmatprep.subr.bf16.mxu0 %v692
    %938 = vmatpush1.bf16.msra.mxu0 %v691
    %939 = vmatprep.subr.bf16.mxu0 %v696
    %940 = vmatpush1.bf16.msra.mxu0 %v695
    %941 = vmatprep.subr.bf16.mxu0 %v700
    %942 = vmatpush1.bf16.msra.mxu0 %v699
    %943 = vmatprep.subr.bf16.mxu0 %v704
    %944 = vmatpush1.bf16.msra.mxu0 %v703
    %945 = vmatprep.subr.bf16.mxu0 %v708
    %946 = vmatpush1.bf16.msra.mxu0 %v707
    %947 = vmatprep.subr.bf16.mxu0 %v712
    %948 = vmatpush1.bf16.msra.mxu0 %v711
    %949 = vmatprep.subr.bf16.mxu0 %v716
    %950 = vmatpush1.bf16.msra.mxu0 %v715
    %951 = vmatprep.subr.bf16.mxu0 %v720
    %952 = vmatpush1.bf16.msra.mxu0 %v719
    %953 = vmatprep.subr.bf16.mxu0 %v724
    %954 = vmatpush1.bf16.msra.mxu0 %v723
    %955 = vmatprep.subr.bf16.mxu0 %v728
    %956 = vmatpush1.bf16.msra.mxu0 %v727
    %957 = vmatprep.subr.bf16.mxu0 %v732
    %958 = vmatpush1.bf16.msra.mxu0 %v731
    %959 = vmatprep.mubr.bf16.mxu0 %v106
    %960 = vmatmul.mubr.bf16.gmra.mrb[0].mxu0 %v105
    %v961 = vpop.f32.mrb[0].mxu0
    %v962 = vadd.f32 %v270, %v961
    %v963 = vpop.f32.mrb[0].mxu0
    %v964 = vadd.f32 %v274, %v963
    %v965 = vpop.f32.mrb[0].mxu0
    %v966 = vadd.f32 %v270, %v965
    %v967 = vpop.f32.mrb[0].mxu0
    %v968 = vadd.f32 %v274, %v967
    %969 = vmatprep.mubr.bf16.mxu0 %v110
    %970 = vmatmul.mubr.bf16.gmra.mrb[0].mxu0 %v109
    %v971 = vpop.f32.mrb[0].mxu0
    %v972 = vadd.f32 %v270, %v971
    %v973 = vpop.f32.mrb[0].mxu0
    %v974 = vadd.f32 %v274, %v973
    %v975 = vpop.f32.mrb[0].mxu0
    %v976 = vadd.f32 %v270, %v975
    %v977 = vpop.f32.mrb[0].mxu0
    %v978 = vadd.f32 %v274, %v977
    %979 = vmatprep.mubr.bf16.mxu0 %v114
    %980 = vmatmul.mubr.bf16.gmra.mrb[0].mxu0 %v113
    %v981 = vpop.f32.mrb[0].mxu0
    %v982 = vadd.f32 %v270, %v981
    %v983 = vpop.f32.mrb[0].mxu0
    %v984 = vadd.f32 %v274, %v983
    %v985 = vpop.f32.mrb[0].mxu0
    %v986 = vadd.f32 %v270, %v985
    %v987 = vpop.f32.mrb[0].mxu0
    %v988 = vadd.f32 %v274, %v987
    %989 = vmatprep.mubr.bf16.mxu0 %v118
    %990 = vmatmul.mubr.bf16.gmra.mrb[0].mxu0 %v117
    %v991 = vpop.f32.mrb[0].mxu0
    %v992 = vadd.f32 %v270, %v991
    %v993 = vpop.f32.mrb[0].mxu0
    %v994 = vadd.f32 %v274, %v993
    %v995 = vpop.f32.mrb[0].mxu0
    %v996 = vadd.f32 %v270, %v995
    %v997 = vpop.f32.mrb[0].mxu0
    %v998 = vadd.f32 %v274, %v997
    %999 = vmatprep.mubr.bf16.mxu0 %v122
    %1000 = vmatmul.mubr.bf16.gmra.mrb[0].mxu0 %v121
    %v1001 = vpop.f32.mrb[0].mxu0
    %v1002 = vadd.f32 %v270, %v1001
    %v1003 = vpop.f32.mrb[0].mxu0
    %v1004 = vadd.f32 %v274, %v1003
    %v1005 = vpop.f32.mrb[0].mxu0
    %v1006 = vadd.f32 %v270, %v1005
    %v1007 = vpop.f32.mrb[0].mxu0
    %v1008 = vadd.f32 %v274, %v1007
    %1009 = vmatprep.mubr.bf16.mxu0 %v126
    %1010 = vmatmul.mubr.bf16.gmra.mrb[0].mxu0 %v125
    %v1011 = vpop.f32.mrb[0].mxu0
    %v1012 = vadd.f32 %v270, %v1011
    %v1013 = vpop.f32.mrb[0].mxu0
    %v1014 = vadd.f32 %v274, %v1013
    %v1015 = vpop.f32.mrb[0].mxu0
    %v1016 = vadd.f32 %v270, %v1015
    %v1017 = vpop.f32.mrb[0].mxu0
    %v1018 = vadd.f32 %v274, %v1017
    %1019 = vmatprep.mubr.bf16.mxu0 %v130
    %1020 = vmatmul.mubr.bf16.gmra.mrb[0].mxu0 %v129
    %v1021 = vpop.f32.mrb[0].mxu0
    %v1022 = vadd.f32 %v270, %v1021
    %v1023 = vpop.f32.mrb[0].mxu0
    %v1024 = vadd.f32 %v274, %v1023
    %v1025 = vpop.f32.mrb[0].mxu0
    %v1026 = vadd.f32 %v270, %v1025
    %v1027 = vpop.f32.mrb[0].mxu0
    %v1028 = vadd.f32 %v274, %v1027
    %1029 = vmatprep.mubr.bf16.mxu0 %v134
    %1030 = vmatmul.mubr.bf16.gmra.mrb[0].mxu0 %v133
    %v1031 = vpop.f32.mrb[0].mxu0
    %v1032 = vadd.f32 %v270, %v1031
    %v1033 = vpop.f32.mrb[0].mxu0
    %v1034 = vadd.f32 %v274, %v1033
    %v1035 = vpop.f32.mrb[0].mxu0
    %v1036 = vadd.f32 %v270, %v1035
    %v1037 = vpop.f32.mrb[0].mxu0
    %v1038 = vadd.f32 %v274, %v1037
    %1039 = vdwg.mxu0
    %1040 = vmatprep.subr.bf16.mxu0 %v736
    %1041 = vmatpush1.bf16.msra.mxu0 %v735
    %1042 = vmatprep.subr.bf16.mxu0 %v740
    %1043 = vmatpush1.bf16.msra.mxu0 %v739
    %1044 = vmatprep.subr.bf16.mxu0 %v744
    %1045 = vmatpush1.bf16.msra.mxu0 %v743
    %1046 = vmatprep.subr.bf16.mxu0 %v748
    %1047 = vmatpush1.bf16.msra.mxu0 %v747
    %1048 = vmatprep.subr.bf16.mxu0 %v752
    %1049 = vmatpush1.bf16.msra.mxu0 %v751
    %1050 = vmatprep.subr.bf16.mxu0 %v756
    %1051 = vmatpush1.bf16.msra.mxu0 %v755
    %1052 = vmatprep.subr.bf16.mxu0 %v760
    %1053 = vmatpush1.bf16.msra.mxu0 %v759
    %1054 = vmatprep.subr.bf16.mxu0 %v764
    %1055 = vmatpush1.bf16.msra.mxu0 %v763
    %1056 = vmatprep.subr.bf16.mxu0 %v768
    %1057 = vmatpush1.bf16.msra.mxu0 %v767
    %1058 = vmatprep.subr.bf16.mxu0 %v772
    %1059 = vmatpush1.bf16.msra.mxu0 %v771
    %1060 = vmatprep.subr.bf16.mxu0 %v776
    %1061 = vmatpush1.bf16.msra.mxu0 %v775
    %1062 = vmatprep.subr.bf16.mxu0 %v780
    %1063 = vmatpush1.bf16.msra.mxu0 %v779
    %1064 = vmatprep.subr.bf16.mxu0 %v784
    %1065 = vmatpush1.bf16.msra.mxu0 %v783
    %1066 = vmatprep.subr.bf16.mxu0 %v788
    %1067 = vmatpush1.bf16.msra.mxu0 %v787
    %1068 = vmatprep.subr.bf16.mxu0 %v792
    %1069 = vmatpush1.bf16.msra.mxu0 %v791
    %1070 = vmatprep.subr.bf16.mxu0 %v796
    %1071 = vmatpush1.bf16.msra.mxu0 %v795
    %1072 = vmatprep.mubr.bf16.mxu0 %v108
    %1073 = vmatmul.mubr.bf16.gmra.mrb[0].mxu0 %v107
    %v1074 = vpop.f32.mrb[0].mxu0
    %v1075 = vadd.f32 %v962, %v1074
    %v1076 = vpop.f32.mrb[0].mxu0
    %v1077 = vadd.f32 %v964, %v1076
    %v1078 = vpop.f32.mrb[0].mxu0
    %v1079 = vadd.f32 %v966, %v1078
    %v1080 = vpop.f32.mrb[0].mxu0
    %v1081 = vadd.f32 %v968, %v1080
    %1082 = vmatprep.mubr.bf16.mxu0 %v112
    %1083 = vmatmul.mubr.bf16.gmra.mrb[0].mxu0 %v111
    %v1084 = vpop.f32.mrb[0].mxu0
    %v1085 = vadd.f32 %v972, %v1084
    %v1086 = vpop.f32.mrb[0].mxu0
    %v1087 = vadd.f32 %v974, %v1086
    %v1088 = vpop.f32.mrb[0].mxu0
    %v1089 = vadd.f32 %v976, %v1088
    %v1090 = vpop.f32.mrb[0].mxu0
    %v1091 = vadd.f32 %v978, %v1090
    %1092 = vmatprep.mubr.bf16.mxu0 %v116
    %1093 = vmatmul.mubr.bf16.gmra.mrb[0].mxu0 %v115
    %v1094 = vpop.f32.mrb[0].mxu0
    %v1095 = vadd.f32 %v982, %v1094
    %v1096 = vpop.f32.mrb[0].mxu0
    %v1097 = vadd.f32 %v984, %v1096
    %v1098 = vpop.f32.mrb[0].mxu0
    %v1099 = vadd.f32 %v986, %v1098
    %v1100 = vpop.f32.mrb[0].mxu0
    %v1101 = vadd.f32 %v988, %v1100
    %1102 = vmatprep.mubr.bf16.mxu0 %v120
    %1103 = vmatmul.mubr.bf16.gmra.mrb[0].mxu0 %v119
    %v1104 = vpop.f32.mrb[0].mxu0
    %v1105 = vadd.f32 %v992, %v1104
    %v1106 = vpop.f32.mrb[0].mxu0
    %v1107 = vadd.f32 %v994, %v1106
    %v1108 = vpop.f32.mrb[0].mxu0
    %v1109 = vadd.f32 %v996, %v1108
    %v1110 = vpop.f32.mrb[0].mxu0
    %v1111 = vadd.f32 %v998, %v1110
    %1112 = vmatprep.mubr.bf16.mxu0 %v124
    %1113 = vmatmul.mubr.bf16.gmra.mrb[0].mxu0 %v123
    %v1114 = vpop.f32.mrb[0].mxu0
    %v1115 = vadd.f32 %v1002, %v1114
    %v1116 = vpop.f32.mrb[0].mxu0
    %v1117 = vadd.f32 %v1004, %v1116
    %v1118 = vpop.f32.mrb[0].mxu0
    %v1119 = vadd.f32 %v1006, %v1118
    %v1120 = vpop.f32.mrb[0].mxu0
    %v1121 = vadd.f32 %v1008, %v1120
    %1122 = vmatprep.mubr.bf16.mxu0 %v128
    %1123 = vmatmul.mubr.bf16.gmra.mrb[0].mxu0 %v127
    %v1124 = vpop.f32.mrb[0].mxu0
    %v1125 = vadd.f32 %v1012, %v1124
    %v1126 = vpop.f32.mrb[0].mxu0
    %v1127 = vadd.f32 %v1014, %v1126
    %v1128 = vpop.f32.mrb[0].mxu0
    %v1129 = vadd.f32 %v1016, %v1128
    %v1130 = vpop.f32.mrb[0].mxu0
    %v1131 = vadd.f32 %v1018, %v1130
    %1132 = vmatprep.mubr.bf16.mxu0 %v132
    %1133 = vmatmul.mubr.bf16.gmra.mrb[0].mxu0 %v131
    %v1134 = vpop.f32.mrb[0].mxu0
    %v1135 = vadd.f32 %v1022, %v1134
    %v1136 = vpop.f32.mrb[0].mxu0
    %v1137 = vadd.f32 %v1024, %v1136
    %v1138 = vpop.f32.mrb[0].mxu0
    %v1139 = vadd.f32 %v1026, %v1138
    %v1140 = vpop.f32.mrb[0].mxu0
    %v1141 = vadd.f32 %v1028, %v1140
    %1142 = vmatprep.mubr.bf16.mxu0 %v136
    %1143 = vmatmul.mubr.bf16.gmra.mrb[0].mxu0 %v135
    %v1144 = vpop.f32.mrb[0].mxu0
    %v1145 = vadd.f32 %v1032, %v1144
    %v1146 = vpop.f32.mrb[0].mxu0
    %v1147 = vadd.f32 %v1034, %v1146
    %v1148 = vpop.f32.mrb[0].mxu0
    %v1149 = vadd.f32 %v1036, %v1148
    %v1150 = vpop.f32.mrb[0].mxu0
    %v1151 = vadd.f32 %v1038, %v1150
    %1152 = vdwg.mxu0
    %1153 = vmatprep.subr.bf16.mxu0 %v674
    %1154 = vmatpush1.bf16.msra.mxu0 %v673
    %1155 = vmatprep.subr.bf16.mxu0 %v678
    %1156 = vmatpush1.bf16.msra.mxu0 %v677
    %1157 = vmatprep.subr.bf16.mxu0 %v682
    %1158 = vmatpush1.bf16.msra.mxu0 %v681
    %1159 = vmatprep.subr.bf16.mxu0 %v686
    %1160 = vmatpush1.bf16.msra.mxu0 %v685
    %1161 = vmatprep.subr.bf16.mxu0 %v690
    %1162 = vmatpush1.bf16.msra.mxu0 %v689
    %1163 = vmatprep.subr.bf16.mxu0 %v694
    %1164 = vmatpush1.bf16.msra.mxu0 %v693
    %1165 = vmatprep.subr.bf16.mxu0 %v698
    %1166 = vmatpush1.bf16.msra.mxu0 %v697
    %1167 = vmatprep.subr.bf16.mxu0 %v702
    %1168 = vmatpush1.bf16.msra.mxu0 %v701
    %1169 = vmatprep.subr.bf16.mxu0 %v706
    %1170 = vmatpush1.bf16.msra.mxu0 %v705
    %1171 = vmatprep.subr.bf16.mxu0 %v710
    %1172 = vmatpush1.bf16.msra.mxu0 %v709
    %1173 = vmatprep.subr.bf16.mxu0 %v714
    %1174 = vmatpush1.bf16.msra.mxu0 %v713
    %1175 = vmatprep.subr.bf16.mxu0 %v718
    %1176 = vmatpush1.bf16.msra.mxu0 %v717
    %1177 = vmatprep.subr.bf16.mxu0 %v722
    %1178 = vmatpush1.bf16.msra.mxu0 %v721
    %1179 = vmatprep.subr.bf16.mxu0 %v726
    %1180 = vmatpush1.bf16.msra.mxu0 %v725
    %1181 = vmatprep.subr.bf16.mxu0 %v730
    %1182 = vmatpush1.bf16.msra.mxu0 %v729
    %1183 = vmatprep.subr.bf16.mxu0 %v734
    %1184 = vmatpush1.bf16.msra.mxu0 %v733
    %1185 = vmatprep.mubr.bf16.mxu0 %v106
    %1186 = vmatmul.mubr.bf16.gmra.mrb[0].mxu0 %v105
    %v1187 = vpop.f32.mrb[0].mxu0
    %v1188 = vadd.f32 %v278, %v1187
    %v1189 = vpop.f32.mrb[0].mxu0
    %v1190 = vadd.f32 %v282, %v1189
    %v1191 = vpop.f32.mrb[0].mxu0
    %v1192 = vadd.f32 %v278, %v1191
    %v1193 = vpop.f32.mrb[0].mxu0
    %v1194 = vadd.f32 %v282, %v1193
    %1195 = vmatprep.mubr.bf16.mxu0 %v110
    %1196 = vmatmul.mubr.bf16.gmra.mrb[0].mxu0 %v109
    %v1197 = vpop.f32.mrb[0].mxu0
    %v1198 = vadd.f32 %v278, %v1197
    %v1199 = vpop.f32.mrb[0].mxu0
    %v1200 = vadd.f32 %v282, %v1199
    %v1201 = vpop.f32.mrb[0].mxu0
    %v1202 = vadd.f32 %v278, %v1201
    %v1203 = vpop.f32.mrb[0].mxu0
    %v1204 = vadd.f32 %v282, %v1203
    %1205 = vmatprep.mubr.bf16.mxu0 %v114
    %1206 = vmatmul.mubr.bf16.gmra.mrb[0].mxu0 %v113
    %v1207 = vpop.f32.mrb[0].mxu0
    %v1208 = vadd.f32 %v278, %v1207
    %v1209 = vpop.f32.mrb[0].mxu0
    %v1210 = vadd.f32 %v282, %v1209
    %v1211 = vpop.f32.mrb[0].mxu0
    %v1212 = vadd.f32 %v278, %v1211
    %v1213 = vpop.f32.mrb[0].mxu0
    %v1214 = vadd.f32 %v282, %v1213
    %1215 = vmatprep.mubr.bf16.mxu0 %v118
    %1216 = vmatmul.mubr.bf16.gmra.mrb[0].mxu0 %v117
    %v1217 = vpop.f32.mrb[0].mxu0
    %v1218 = vadd.f32 %v278, %v1217
    %v1219 = vpop.f32.mrb[0].mxu0
    %v1220 = vadd.f32 %v282, %v1219
    %v1221 = vpop.f32.mrb[0].mxu0
    %v1222 = vadd.f32 %v278, %v1221
    %v1223 = vpop.f32.mrb[0].mxu0
    %v1224 = vadd.f32 %v282, %v1223
    %1225 = vmatprep.mubr.bf16.mxu0 %v122
    %1226 = vmatmul.mubr.bf16.gmra.mrb[0].mxu0 %v121
    %v1227 = vpop.f32.mrb[0].mxu0
    %v1228 = vadd.f32 %v278, %v1227
    %v1229 = vpop.f32.mrb[0].mxu0
    %v1230 = vadd.f32 %v282, %v1229
    %v1231 = vpop.f32.mrb[0].mxu0
    %v1232 = vadd.f32 %v278, %v1231
    %v1233 = vpop.f32.mrb[0].mxu0
    %v1234 = vadd.f32 %v282, %v1233
    %1235 = vmatprep.mubr.bf16.mxu0 %v126
    %1236 = vmatmul.mubr.bf16.gmra.mrb[0].mxu0 %v125
    %v1237 = vpop.f32.mrb[0].mxu0
    %v1238 = vadd.f32 %v278, %v1237
    %v1239 = vpop.f32.mrb[0].mxu0
    %v1240 = vadd.f32 %v282, %v1239
    %v1241 = vpop.f32.mrb[0].mxu0
    %v1242 = vadd.f32 %v278, %v1241
    %v1243 = vpop.f32.mrb[0].mxu0
    %v1244 = vadd.f32 %v282, %v1243
    %1245 = vmatprep.mubr.bf16.mxu0 %v130
    %1246 = vmatmul.mubr.bf16.gmra.mrb[0].mxu0 %v129
    %v1247 = vpop.f32.mrb[0].mxu0
    %v1248 = vadd.f32 %v278, %v1247
    %v1249 = vpop.f32.mrb[0].mxu0
    %v1250 = vadd.f32 %v282, %v1249
    %v1251 = vpop.f32.mrb[0].mxu0
    %v1252 = vadd.f32 %v278, %v1251
    %v1253 = vpop.f32.mrb[0].mxu0
    %v1254 = vadd.f32 %v282, %v1253
    %1255 = vmatprep.mubr.bf16.mxu0 %v134
    %1256 = vmatmul.mubr.bf16.gmra.mrb[0].mxu0 %v133
    %v1257 = vpop.f32.mrb[0].mxu0
    %v1258 = vadd.f32 %v278, %v1257
    %v1259 = vpop.f32.mrb[0].mxu0
    %v1260 = vadd.f32 %v282, %v1259
    %v1261 = vpop.f32.mrb[0].mxu0
    %v1262 = vadd.f32 %v278, %v1261
    %v1263 = vpop.f32.mrb[0].mxu0
    %v1264 = vadd.f32 %v282, %v1263
    %1265 = vdwg.mxu0
    %1266 = vmatprep.subr.bf16.mxu0 %v738
    %1267 = vmatpush1.bf16.msra.mxu0 %v737
    %1268 = vmatprep.subr.bf16.mxu0 %v742
    %1269 = vmatpush1.bf16.msra.mxu0 %v741
    %1270 = vmatprep.subr.bf16.mxu0 %v746
    %1271 = vmatpush1.bf16.msra.mxu0 %v745
    %1272 = vmatprep.subr.bf16.mxu0 %v750
    %1273 = vmatpush1.bf16.msra.mxu0 %v749
    %1274 = vmatprep.subr.bf16.mxu0 %v754
    %1275 = vmatpush1.bf16.msra.mxu0 %v753
    %1276 = vmatprep.subr.bf16.mxu0 %v758
    %1277 = vmatpush1.bf16.msra.mxu0 %v757
    %1278 = vmatprep.subr.bf16.mxu0 %v762
    %1279 = vmatpush1.bf16.msra.mxu0 %v761
    %1280 = vmatprep.subr.bf16.mxu0 %v766
    %1281 = vmatpush1.bf16.msra.mxu0 %v765
    %1282 = vmatprep.subr.bf16.mxu0 %v770
    %1283 = vmatpush1.bf16.msra.mxu0 %v769
    %1284 = vmatprep.subr.bf16.mxu0 %v774
    %1285 = vmatpush1.bf16.msra.mxu0 %v773
    %1286 = vmatprep.subr.bf16.mxu0 %v778
    %1287 = vmatpush1.bf16.msra.mxu0 %v777
    %1288 = vmatprep.subr.bf16.mxu0 %v782
    %1289 = vmatpush1.bf16.msra.mxu0 %v781
    %1290 = vmatprep.subr.bf16.mxu0 %v786
    %1291 = vmatpush1.bf16.msra.mxu0 %v785
    %1292 = vmatprep.subr.bf16.mxu0 %v790
    %1293 = vmatpush1.bf16.msra.mxu0 %v789
    %1294 = vmatprep.subr.bf16.mxu0 %v794
    %1295 = vmatpush1.bf16.msra.mxu0 %v793
    %1296 = vmatprep.subr.bf16.mxu0 %v798
    %1297 = vmatpush1.bf16.msra.mxu0 %v797
    %1298 = vmatprep.mubr.bf16.mxu0 %v108
    %1299 = vmatmul.mubr.bf16.gmra.mrb[0].mxu0 %v107
    %v1300 = vpop.f32.mrb[0].mxu0
    %v1301 = vadd.f32 %v1188, %v1300
    %v1302 = vpop.f32.mrb[0].mxu0
    %v1303 = vadd.f32 %v1190, %v1302
    %v1304 = vpop.f32.mrb[0].mxu0
    %v1305 = vadd.f32 %v1192, %v1304
    %v1306 = vpop.f32.mrb[0].mxu0
    %v1307 = vadd.f32 %v1194, %v1306
    %1308 = vmatprep.mubr.bf16.mxu0 %v112
    %1309 = vmatmul.mubr.bf16.gmra.mrb[0].mxu0 %v111
    %v1310 = vpop.f32.mrb[0].mxu0
    %v1311 = vadd.f32 %v1198, %v1310
    %v1312 = vpop.f32.mrb[0].mxu0
    %v1313 = vadd.f32 %v1200, %v1312
    %v1314 = vpop.f32.mrb[0].mxu0
    %v1315 = vadd.f32 %v1202, %v1314
    %v1316 = vpop.f32.mrb[0].mxu0
    %v1317 = vadd.f32 %v1204, %v1316
    %1318 = vmatprep.mubr.bf16.mxu0 %v116
    %1319 = vmatmul.mubr.bf16.gmra.mrb[0].mxu0 %v115
    %v1320 = vpop.f32.mrb[0].mxu0
    %v1321 = vadd.f32 %v1208, %v1320
    %v1322 = vpop.f32.mrb[0].mxu0
    %v1323 = vadd.f32 %v1210, %v1322
    %v1324 = vpop.f32.mrb[0].mxu0
    %v1325 = vadd.f32 %v1212, %v1324
    %v1326 = vpop.f32.mrb[0].mxu0
    %v1327 = vadd.f32 %v1214, %v1326
    %1328 = vmatprep.mubr.bf16.mxu0 %v120
    %1329 = vmatmul.mubr.bf16.gmra.mrb[0].mxu0 %v119
    %v1330 = vpop.f32.mrb[0].mxu0
    %v1331 = vadd.f32 %v1218, %v1330
    %v1332 = vpop.f32.mrb[0].mxu0
    %v1333 = vadd.f32 %v1220, %v1332
    %v1334 = vpop.f32.mrb[0].mxu0
    %v1335 = vadd.f32 %v1222, %v1334
    %v1336 = vpop.f32.mrb[0].mxu0
    %v1337 = vadd.f32 %v1224, %v1336
    %1338 = vmatprep.mubr.bf16.mxu0 %v124
    %1339 = vmatmul.mubr.bf16.gmra.mrb[0].mxu0 %v123
    %v1340 = vpop.f32.mrb[0].mxu0
    %v1341 = vadd.f32 %v1228, %v1340
    %v1342 = vpop.f32.mrb[0].mxu0
    %v1343 = vadd.f32 %v1230, %v1342
    %v1344 = vpop.f32.mrb[0].mxu0
    %v1345 = vadd.f32 %v1232, %v1344
    %v1346 = vpop.f32.mrb[0].mxu0
    %v1347 = vadd.f32 %v1234, %v1346
    %1348 = vmatprep.mubr.bf16.mxu0 %v128
    %1349 = vmatmul.mubr.bf16.gmra.mrb[0].mxu0 %v127
    %v1350 = vpop.f32.mrb[0].mxu0
    %v1351 = vadd.f32 %v1238, %v1350
    %v1352 = vpop.f32.mrb[0].mxu0
    %v1353 = vadd.f32 %v1240, %v1352
    %v1354 = vpop.f32.mrb[0].mxu0
    %v1355 = vadd.f32 %v1242, %v1354
    %v1356 = vpop.f32.mrb[0].mxu0
    %v1357 = vadd.f32 %v1244, %v1356
    %1358 = vmatprep.mubr.bf16.mxu0 %v132
    %1359 = vmatmul.mubr.bf16.gmra.mrb[0].mxu0 %v131
    %v1360 = vpop.f32.mrb[0].mxu0
    %v1361 = vadd.f32 %v1248, %v1360
    %v1362 = vpop.f32.mrb[0].mxu0
    %v1363 = vadd.f32 %v1250, %v1362
    %v1364 = vpop.f32.mrb[0].mxu0
    %v1365 = vadd.f32 %v1252, %v1364
    %v1366 = vpop.f32.mrb[0].mxu0
    %v1367 = vadd.f32 %v1254, %v1366
    %1368 = vmatprep.mubr.bf16.mxu0 %v136
    %1369 = vmatmul.mubr.bf16.gmra.mrb[0].mxu0 %v135
    %v1370 = vpop.f32.mrb[0].mxu0
    %v1371 = vadd.f32 %v1258, %v1370
    %v1372 = vpop.f32.mrb[0].mxu0
    %v1373 = vadd.f32 %v1260, %v1372
    %v1374 = vpop.f32.mrb[0].mxu0
    %v1375 = vadd.f32 %v1262, %v1374
    %v1376 = vpop.f32.mrb[0].mxu0
    %v1377 = vadd.f32 %v1264, %v1376
    %1378 = vdwg.mxu0
    %vm1379 = vcmp.gt.f32.partialorder %v1075, 0.0
    %vm1380 = vcmp.gt.f32.partialorder %v1077, 0.0
    %vm1381 = vcmp.gt.f32.partialorder %v1301, 0.0
    %vm1382 = vcmp.gt.f32.partialorder %v1303, 0.0
    %vm1383 = vcmp.gt.f32.partialorder %v1079, 0.0
    %vm1384 = vcmp.gt.f32.partialorder %v1081, 0.0
    %vm1385 = vcmp.gt.f32.partialorder %v1305, 0.0
    %vm1386 = vcmp.gt.f32.partialorder %v1307, 0.0
    %vm1387 = vcmp.gt.f32.partialorder %v1085, 0.0
    %vm1388 = vcmp.gt.f32.partialorder %v1087, 0.0
    %vm1389 = vcmp.gt.f32.partialorder %v1311, 0.0
    %vm1390 = vcmp.gt.f32.partialorder %v1313, 0.0
    %vm1391 = vcmp.gt.f32.partialorder %v1089, 0.0
    %vm1392 = vcmp.gt.f32.partialorder %v1091, 0.0
    %vm1393 = vcmp.gt.f32.partialorder %v1315, 0.0
    %vm1394 = vcmp.gt.f32.partialorder %v1317, 0.0
    %vm1395 = vcmp.gt.f32.partialorder %v1095, 0.0
    %vm1396 = vcmp.gt.f32.partialorder %v1097, 0.0
    %vm1397 = vcmp.gt.f32.partialorder %v1321, 0.0
    %vm1398 = vcmp.gt.f32.partialorder %v1323, 0.0
    %vm1399 = vcmp.gt.f32.partialorder %v1099, 0.0
    %vm1400 = vcmp.gt.f32.partialorder %v1101, 0.0
    %vm1401 = vcmp.gt.f32.partialorder %v1325, 0.0
    %vm1402 = vcmp.gt.f32.partialorder %v1327, 0.0
    %vm1403 = vcmp.gt.f32.partialorder %v1105, 0.0
    %vm1404 = vcmp.gt.f32.partialorder %v1107, 0.0
    %vm1405 = vcmp.gt.f32.partialorder %v1331, 0.0
    %vm1406 = vcmp.gt.f32.partialorder %v1333, 0.0
    %vm1407 = vcmp.gt.f32.partialorder %v1109, 0.0
    %vm1408 = vcmp.gt.f32.partialorder %v1111, 0.0
    %vm1409 = vcmp.gt.f32.partialorder %v1335, 0.0
    %vm1410 = vcmp.gt.f32.partialorder %v1337, 0.0
    %vm1411 = vcmp.gt.f32.partialorder %v1115, 0.0
    %vm1412 = vcmp.gt.f32.partialorder %v1117, 0.0
    %vm1413 = vcmp.gt.f32.partialorder %v1341, 0.0
    %vm1414 = vcmp.gt.f32.partialorder %v1343, 0.0
    %vm1415 = vcmp.gt.f32.partialorder %v1119, 0.0
    %vm1416 = vcmp.gt.f32.partialorder %v1121, 0.0
    %vm1417 = vcmp.gt.f32.partialorder %v1345, 0.0
    %vm1418 = vcmp.gt.f32.partialorder %v1347, 0.0
    %vm1419 = vcmp.gt.f32.partialorder %v1125, 0.0
    %vm1420 = vcmp.gt.f32.partialorder %v1127, 0.0
    %vm1421 = vcmp.gt.f32.partialorder %v1351, 0.0
    %vm1422 = vcmp.gt.f32.partialorder %v1353, 0.0
    %vm1423 = vcmp.gt.f32.partialorder %v1129, 0.0
    %vm1424 = vcmp.gt.f32.partialorder %v1131, 0.0
    %vm1425 = vcmp.gt.f32.partialorder %v1355, 0.0
    %vm1426 = vcmp.gt.f32.partialorder %v1357, 0.0
    %vm1427 = vcmp.gt.f32.partialorder %v1135, 0.0
    %vm1428 = vcmp.gt.f32.partialorder %v1137, 0.0
    %vm1429 = vcmp.gt.f32.partialorder %v1361, 0.0
    %vm1430 = vcmp.gt.f32.partialorder %v1363, 0.0
    %vm1431 = vcmp.gt.f32.partialorder %v1139, 0.0
    %vm1432 = vcmp.gt.f32.partialorder %v1141, 0.0
    %vm1433 = vcmp.gt.f32.partialorder %v1365, 0.0
    %vm1434 = vcmp.gt.f32.partialorder %v1367, 0.0
    %vm1435 = vcmp.gt.f32.partialorder %v1145, 0.0
    %vm1436 = vcmp.gt.f32.partialorder %v1147, 0.0
    %vm1437 = vcmp.gt.f32.partialorder %v1371, 0.0
    %vm1438 = vcmp.gt.f32.partialorder %v1373, 0.0
    %vm1439 = vcmp.gt.f32.partialorder %v1149, 0.0
    %vm1440 = vcmp.gt.f32.partialorder %v1151, 0.0
    %vm1441 = vcmp.gt.f32.partialorder %v1375, 0.0
    %vm1442 = vcmp.gt.f32.partialorder %v1377, 0.0
    %v1443 = vmul.f32 %v1075, 0.2
    %v1444 = vmul.f32 %v1077, 0.2
    %v1445 = vmul.f32 %v1301, 0.2
    %v1446 = vmul.f32 %v1303, 0.2
    %v1447 = vmul.f32 %v1079, 0.2
    %v1448 = vmul.f32 %v1081, 0.2
    %v1449 = vmul.f32 %v1305, 0.2
    %v1450 = vmul.f32 %v1307, 0.2
    %v1451 = vmul.f32 %v1085, 0.2
    %v1452 = vmul.f32 %v1087, 0.2
    %v1453 = vmul.f32 %v1311, 0.2
    %v1454 = vmul.f32 %v1313, 0.2
    %v1455 = vmul.f32 %v1089, 0.2
    %v1456 = vmul.f32 %v1091, 0.2
    %v1457 = vmul.f32 %v1315, 0.2
    %v1458 = vmul.f32 %v1317, 0.2
    %v1459 = vmul.f32 %v1095, 0.2
    %v1460 = vmul.f32 %v1097, 0.2
    %v1461 = vmul.f32 %v1321, 0.2
    %v1462 = vmul.f32 %v1323, 0.2
    %v1463 = vmul.f32 %v1099, 0.2
    %v1464 = vmul.f32 %v1101, 0.2
    %v1465 = vmul.f32 %v1325, 0.2
    %v1466 = vmul.f32 %v1327, 0.2
    %v1467 = vmul.f32 %v1105, 0.2
    %v1468 = vmul.f32 %v1107, 0.2
    %v1469 = vmul.f32 %v1331, 0.2
    %v1470 = vmul.f32 %v1333, 0.2
    %v1471 = vmul.f32 %v1109, 0.2
    %v1472 = vmul.f32 %v1111, 0.2
    %v1473 = vmul.f32 %v1335, 0.2
    %v1474 = vmul.f32 %v1337, 0.2
    %v1475 = vmul.f32 %v1115, 0.2
    %v1476 = vmul.f32 %v1117, 0.2
    %v1477 = vmul.f32 %v1341, 0.2
    %v1478 = vmul.f32 %v1343, 0.2
    %v1479 = vmul.f32 %v1119, 0.2
    %v1480 = vmul.f32 %v1121, 0.2
    %v1481 = vmul.f32 %v1345, 0.2
    %v1482 = vmul.f32 %v1347, 0.2
    %v1483 = vmul.f32 %v1125, 0.2
    %v1484 = vmul.f32 %v1127, 0.2
    %v1485 = vmul.f32 %v1351, 0.2
    %v1486 = vmul.f32 %v1353, 0.2
    %v1487 = vmul.f32 %v1129, 0.2
    %v1488 = vmul.f32 %v1131, 0.2
    %v1489 = vmul.f32 %v1355, 0.2
    %v1490 = vmul.f32 %v1357, 0.2
    %v1491 = vmul.f32 %v1135, 0.2
    %v1492 = vmul.f32 %v1137, 0.2
    %v1493 = vmul.f32 %v1361, 0.2
    %v1494 = vmul.f32 %v1363, 0.2
    %v1495 = vmul.f32 %v1139, 0.2
    %v1496 = vmul.f32 %v1141, 0.2
    %v1497 = vmul.f32 %v1365, 0.2
    %v1498 = vmul.f32 %v1367, 0.2
    %v1499 = vmul.f32 %v1145, 0.2
    %v1500 = vmul.f32 %v1147, 0.2
    %v1501 = vmul.f32 %v1371, 0.2
    %v1502 = vmul.f32 %v1373, 0.2
    %v1503 = vmul.f32 %v1149, 0.2
    %v1504 = vmul.f32 %v1151, 0.2
    %v1505 = vmul.f32 %v1375, 0.2
    %v1506 = vmul.f32 %v1377, 0.2
    %v1507 = vsel %vm1379, %v1075, %v1443
    %v1508 = vsel %vm1380, %v1077, %v1444
    %v1509 = vsel %vm1381, %v1301, %v1445
    %v1510 = vsel %vm1382, %v1303, %v1446
    %v1511 = vsel %vm1383, %v1079, %v1447
    %v1512 = vsel %vm1384, %v1081, %v1448
    %v1513 = vsel %vm1385, %v1305, %v1449
    %v1514 = vsel %vm1386, %v1307, %v1450
    %v1515 = vsel %vm1387, %v1085, %v1451
    %v1516 = vsel %vm1388, %v1087, %v1452
    %v1517 = vsel %vm1389, %v1311, %v1453
    %v1518 = vsel %vm1390, %v1313, %v1454
    %v1519 = vsel %vm1391, %v1089, %v1455
    %v1520 = vsel %vm1392, %v1091, %v1456
    %v1521 = vsel %vm1393, %v1315, %v1457
    %v1522 = vsel %vm1394, %v1317, %v1458
    %v1523 = vsel %vm1395, %v1095, %v1459
    %v1524 = vsel %vm1396, %v1097, %v1460
    %v1525 = vsel %vm1397, %v1321, %v1461
    %v1526 = vsel %vm1398, %v1323, %v1462
    %v1527 = vsel %vm1399, %v1099, %v1463
    %v1528 = vsel %vm1400, %v1101, %v1464
    %v1529 = vsel %vm1401, %v1325, %v1465
    %v1530 = vsel %vm1402, %v1327, %v1466
    %v1531 = vsel %vm1403, %v1105, %v1467
    %v1532 = vsel %vm1404, %v1107, %v1468
    %v1533 = vsel %vm1405, %v1331, %v1469
    %v1534 = vsel %vm1406, %v1333, %v1470
    %v1535 = vsel %vm1407, %v1109, %v1471
    %v1536 = vsel %vm1408, %v1111, %v1472
    %v1537 = vsel %vm1409, %v1335, %v1473
    %v1538 = vsel %vm1410, %v1337, %v1474
    %v1539 = vsel %vm1411, %v1115, %v1475
    %v1540 = vsel %vm1412, %v1117, %v1476
    %v1541 = vsel %vm1413, %v1341, %v1477
    %v1542 = vsel %vm1414, %v1343, %v1478
    %v1543 = vsel %vm1415, %v1119, %v1479
    %v1544 = vsel %vm1416, %v1121, %v1480
    %v1545 = vsel %vm1417, %v1345, %v1481
    %v1546 = vsel %vm1418, %v1347, %v1482
    %v1547 = vsel %vm1419, %v1125, %v1483
    %v1548 = vsel %vm1420, %v1127, %v1484
    %v1549 = vsel %vm1421, %v1351, %v1485
    %v1550 = vsel %vm1422, %v1353, %v1486
    %v1551 = vsel %vm1423, %v1129, %v1487
    %v1552 = vsel %vm1424, %v1131, %v1488
    %v1553 = vsel %vm1425, %v1355, %v1489
    %v1554 = vsel %vm1426, %v1357, %v1490
    %v1555 = vsel %vm1427, %v1135, %v1491
    %v1556 = vsel %vm1428, %v1137, %v1492
    %v1557 = vsel %vm1429, %v1361, %v1493
    %v1558 = vsel %vm1430, %v1363, %v1494
    %v1559 = vsel %vm1431, %v1139, %v1495
    %v1560 = vsel %vm1432, %v1141, %v1496
    %v1561 = vsel %vm1433, %v1365, %v1497
    %v1562 = vsel %vm1434, %v1367, %v1498
    %v1563 = vsel %vm1435, %v1145, %v1499
    %v1564 = vsel %vm1436, %v1147, %v1500
    %v1565 = vsel %vm1437, %v1371, %v1501
    %v1566 = vsel %vm1438, %v1373, %v1502
    %v1567 = vsel %vm1439, %v1149, %v1503
    %v1568 = vsel %vm1440, %v1151, %v1504
    %v1569 = vsel %vm1441, %v1375, %v1505
    %v1570 = vsel %vm1442, %v1377, %v1506
    %v1571 = vpack.c.bf16 %v1511, %v1507
    %v1572 = vpack.c.bf16 %v1512, %v1508
    %v1573 = vpack.c.bf16 %v1513, %v1509
    %v1574 = vpack.c.bf16 %v1514, %v1510
    %v1575 = vpack.c.bf16 %v1519, %v1515
    %v1576 = vpack.c.bf16 %v1520, %v1516
    %v1577 = vpack.c.bf16 %v1521, %v1517
    %v1578 = vpack.c.bf16 %v1522, %v1518
    %v1579 = vpack.c.bf16 %v1527, %v1523
    %v1580 = vpack.c.bf16 %v1528, %v1524
    %v1581 = vpack.c.bf16 %v1529, %v1525
    %v1582 = vpack.c.bf16 %v1530, %v1526
    %v1583 = vpack.c.bf16 %v1535, %v1531
    %v1584 = vpack.c.bf16 %v1536, %v1532
    %v1585 = vpack.c.bf16 %v1537, %v1533
    %v1586 = vpack.c.bf16 %v1538, %v1534
    %v1587 = vpack.c.bf16 %v1543, %v1539
    %v1588 = vpack.c.bf16 %v1544, %v1540
    %v1589 = vpack.c.bf16 %v1545, %v1541
    %v1590 = vpack.c.bf16 %v1546, %v1542
    %v1591 = vpack.c.bf16 %v1551, %v1547
    %v1592 = vpack.c.bf16 %v1552, %v1548
    %v1593 = vpack.c.bf16 %v1553, %v1549
    %v1594 = vpack.c.bf16 %v1554, %v1550
    %v1595 = vpack.c.bf16 %v1559, %v1555
    %v1596 = vpack.c.bf16 %v1560, %v1556
    %v1597 = vpack.c.bf16 %v1561, %v1557
    %v1598 = vpack.c.bf16 %v1562, %v1558
    %v1599 = vpack.c.bf16 %v1567, %v1563
    %v1600 = vpack.c.bf16 %v1568, %v1564
    %v1601 = vpack.c.bf16 %v1569, %v1565
    %v1602 = vpack.c.bf16 %v1570, %v1566
    %v1603 = vld [vmem:[%s3] sm:$0xff]
    %v1604 = vld [vmem:[%s3 + $0x8] sm:$0xff]
    %v1605 = vld [vmem:[%s3 + $0x10] sm:$0xff]
    %v1606 = vld [vmem:[%s3 + $0x18] sm:$0xff]
    %v1607 = vld [vmem:[%s3 + $0x20] sm:$0xff]
    %v1608 = vld [vmem:[%s3 + $0x28] sm:$0xff]
    %v1609 = vld [vmem:[%s3 + $0x30] sm:$0xff]
    %v1610 = vld [vmem:[%s3 + $0x38] sm:$0xff]
    %v1611 = vld [vmem:[%s3 + $0x40] sm:$0xff]
    %v1612 = vld [vmem:[%s3 + $0x48] sm:$0xff]
    %v1613 = vld [vmem:[%s3 + $0x50] sm:$0xff]
    %v1614 = vld [vmem:[%s3 + $0x58] sm:$0xff]
    %v1615 = vld [vmem:[%s3 + $0x60] sm:$0xff]
    %v1616 = vld [vmem:[%s3 + $0x68] sm:$0xff]
    %v1617 = vld [vmem:[%s3 + $0x70] sm:$0xff]
    %v1618 = vld [vmem:[%s3 + $0x78] sm:$0xff]
    %v1619 = vld [vmem:[%s3 + $0x80] sm:$0xff]
    %v1620 = vld [vmem:[%s3 + $0x88] sm:$0xff]
    %v1621 = vld [vmem:[%s3 + $0x90] sm:$0xff]
    %v1622 = vld [vmem:[%s3 + $0x98] sm:$0xff]
    %v1623 = vld [vmem:[%s3 + $0xa0] sm:$0xff]
    %v1624 = vld [vmem:[%s3 + $0xa8] sm:$0xff]
    %v1625 = vld [vmem:[%s3 + $0xb0] sm:$0xff]
    %v1626 = vld [vmem:[%s3 + $0xb8] sm:$0xff]
    %v1627 = vld [vmem:[%s3 + $0xc0] sm:$0xff]
    %v1628 = vld [vmem:[%s3 + $0xc8] sm:$0xff]
    %v1629 = vld [vmem:[%s3 + $0xd0] sm:$0xff]
    %v1630 = vld [vmem:[%s3 + $0xd8] sm:$0xff]
    %v1631 = vld [vmem:[%s3 + $0xe0] sm:$0xff]
    %v1632 = vld [vmem:[%s3 + $0xe8] sm:$0xff]
    %v1633 = vld [vmem:[%s3 + $0xf0] sm:$0xff]
    %v1634 = vld [vmem:[%s3 + $0xf8] sm:$0xff]
    %v1635 = vld [vmem:[%s3 + $0x100] sm:$0xff]
    %v1636 = vld [vmem:[%s3 + $0x108] sm:$0xff]
    %v1637 = vld [vmem:[%s3 + $0x110] sm:$0xff]
    %v1638 = vld [vmem:[%s3 + $0x118] sm:$0xff]
    %v1639 = vld [vmem:[%s3 + $0x120] sm:$0xff]
    %v1640 = vld [vmem:[%s3 + $0x128] sm:$0xff]
    %v1641 = vld [vmem:[%s3 + $0x130] sm:$0xff]
    %v1642 = vld [vmem:[%s3 + $0x138] sm:$0xff]
    %v1643 = vld [vmem:[%s3 + $0x140] sm:$0xff]
    %v1644 = vld [vmem:[%s3 + $0x148] sm:$0xff]
    %v1645 = vld [vmem:[%s3 + $0x150] sm:$0xff]
    %v1646 = vld [vmem:[%s3 + $0x158] sm:$0xff]
    %v1647 = vld [vmem:[%s3 + $0x160] sm:$0xff]
    %v1648 = vld [vmem:[%s3 + $0x168] sm:$0xff]
    %v1649 = vld [vmem:[%s3 + $0x170] sm:$0xff]
    %v1650 = vld [vmem:[%s3 + $0x178] sm:$0xff]
    %v1651 = vld [vmem:[%s3 + $0x180] sm:$0xff]
    %v1652 = vld [vmem:[%s3 + $0x188] sm:$0xff]
    %v1653 = vld [vmem:[%s3 + $0x190] sm:$0xff]
    %v1654 = vld [vmem:[%s3 + $0x198] sm:$0xff]
    %v1655 = vld [vmem:[%s3 + $0x1a0] sm:$0xff]
    %v1656 = vld [vmem:[%s3 + $0x1a8] sm:$0xff]
    %v1657 = vld [vmem:[%s3 + $0x1b0] sm:$0xff]
    %v1658 = vld [vmem:[%s3 + $0x1b8] sm:$0xff]
    %v1659 = vld [vmem:[%s3 + $0x1c0] sm:$0xff]
    %v1660 = vld [vmem:[%s3 + $0x1c8] sm:$0xff]
    %v1661 = vld [vmem:[%s3 + $0x1d0] sm:$0xff]
    %v1662 = vld [vmem:[%s3 + $0x1d8] sm:$0xff]
    %v1663 = vld [vmem:[%s3 + $0x1e0] sm:$0xff]
    %v1664 = vld [vmem:[%s3 + $0x1e8] sm:$0xff]
    %v1665 = vld [vmem:[%s3 + $0x1f0] sm:$0xff]
    %v1666 = vld [vmem:[%s3 + $0x1f8] sm:$0xff]
    %v1667 = vld [vmem:[%s4] sm:$0x3]
    %v1669 = vlaneseq
    %v1670 = vshrl.u32 %v1669, 7
    %v1671 = vsub.s32 0, %v1670
    %v1672 = vrot.slane %v1667, %v1671
    %v1673 = vlaneseq
    %v1674 = vshrl.u32 %v1673, 7
    %v1675 = vsub.s32 1, %v1674
    %v1676 = vrot.slane %v1667, %v1675
    %v1743 = vunpack.c.l.b16 %v1603
    %v1744 = vunpack.c.h.b16 %v1603
    %v1745 = vunpack.c.l.b16 %v1604
    %v1746 = vunpack.c.h.b16 %v1604
    %v1747 = vunpack.c.l.b16 %v1605
    %v1748 = vunpack.c.h.b16 %v1605
    %v1749 = vunpack.c.l.b16 %v1606
    %v1750 = vunpack.c.h.b16 %v1606
    %v1751 = vunpack.c.l.b16 %v1607
    %v1752 = vunpack.c.h.b16 %v1607
    %v1753 = vunpack.c.l.b16 %v1608
    %v1754 = vunpack.c.h.b16 %v1608
    %v1755 = vunpack.c.l.b16 %v1609
    %v1756 = vunpack.c.h.b16 %v1609
    %v1757 = vunpack.c.l.b16 %v1610
    %v1758 = vunpack.c.h.b16 %v1610
    %v1759 = vunpack.c.l.b16 %v1611
    %v1760 = vunpack.c.h.b16 %v1611
    %v1761 = vunpack.c.l.b16 %v1612
    %v1762 = vunpack.c.h.b16 %v1612
    %v1763 = vunpack.c.l.b16 %v1613
    %v1764 = vunpack.c.h.b16 %v1613
    %v1765 = vunpack.c.l.b16 %v1614
    %v1766 = vunpack.c.h.b16 %v1614
    %v1767 = vunpack.c.l.b16 %v1615
    %v1768 = vunpack.c.h.b16 %v1615
    %v1769 = vunpack.c.l.b16 %v1616
    %v1770 = vunpack.c.h.b16 %v1616
    %v1771 = vunpack.c.l.b16 %v1617
    %v1772 = vunpack.c.h.b16 %v1617
    %v1773 = vunpack.c.l.b16 %v1618
    %v1774 = vunpack.c.h.b16 %v1618
    %v1775 = vunpack.c.l.b16 %v1619
    %v1776 = vunpack.c.h.b16 %v1619
    %v1777 = vunpack.c.l.b16 %v1620
    %v1778 = vunpack.c.h.b16 %v1620
    %v1779 = vunpack.c.l.b16 %v1621
    %v1780 = vunpack.c.h.b16 %v1621
    %v1781 = vunpack.c.l.b16 %v1622
    %v1782 = vunpack.c.h.b16 %v1622
    %v1783 = vunpack.c.l.b16 %v1623
    %v1784 = vunpack.c.h.b16 %v1623
    %v1785 = vunpack.c.l.b16 %v1624
    %v1786 = vunpack.c.h.b16 %v1624
    %v1787 = vunpack.c.l.b16 %v1625
    %v1788 = vunpack.c.h.b16 %v1625
    %v1789 = vunpack.c.l.b16 %v1626
    %v1790 = vunpack.c.h.b16 %v1626
    %v1791 = vunpack.c.l.b16 %v1627
    %v1792 = vunpack.c.h.b16 %v1627
    %v1793 = vunpack.c.l.b16 %v1628
    %v1794 = vunpack.c.h.b16 %v1628
    %v1795 = vunpack.c.l.b16 %v1629
    %v1796 = vunpack.c.h.b16 %v1629
    %v1797 = vunpack.c.l.b16 %v1630
    %v1798 = vunpack.c.h.b16 %v1630
    %v1799 = vunpack.c.l.b16 %v1631
    %v1800 = vunpack.c.h.b16 %v1631
    %v1801 = vunpack.c.l.b16 %v1632
    %v1802 = vunpack.c.h.b16 %v1632
    %v1803 = vunpack.c.l.b16 %v1633
    %v1804 = vunpack.c.h.b16 %v1633
    %v1805 = vunpack.c.l.b16 %v1634
    %v1806 = vunpack.c.h.b16 %v1634
    %v1807 = vunpack.c.l.b16 %v1635
    %v1808 = vunpack.c.h.b16 %v1635
    %v1809 = vunpack.c.l.b16 %v1636
    %v1810 = vunpack.c.h.b16 %v1636
    %v1811 = vunpack.c.l.b16 %v1637
    %v1812 = vunpack.c.h.b16 %v1637
    %v1813 = vunpack.c.l.b16 %v1638
    %v1814 = vunpack.c.h.b16 %v1638
    %v1815 = vunpack.c.l.b16 %v1639
    %v1816 = vunpack.c.h.b16 %v1639
    %v1817 = vunpack.c.l.b16 %v1640
    %v1818 = vunpack.c.h.b16 %v1640
    %v1819 = vunpack.c.l.b16 %v1641
    %v1820 = vunpack.c.h.b16 %v1641
    %v1821 = vunpack.c.l.b16 %v1642
    %v1822 = vunpack.c.h.b16 %v1642
    %v1823 = vunpack.c.l.b16 %v1643
    %v1824 = vunpack.c.h.b16 %v1643
    %v1825 = vunpack.c.l.b16 %v1644
    %v1826 = vunpack.c.h.b16 %v1644
    %v1827 = vunpack.c.l.b16 %v1645
    %v1828 = vunpack.c.h.b16 %v1645
    %v1829 = vunpack.c.l.b16 %v1646
    %v1830 = vunpack.c.h.b16 %v1646
    %v1831 = vunpack.c.l.b16 %v1647
    %v1832 = vunpack.c.h.b16 %v1647
    %v1833 = vunpack.c.l.b16 %v1648
    %v1834 = vunpack.c.h.b16 %v1648
    %v1835 = vunpack.c.l.b16 %v1649
    %v1836 = vunpack.c.h.b16 %v1649
    %v1837 = vunpack.c.l.b16 %v1650
    %v1838 = vunpack.c.h.b16 %v1650
    %v1839 = vunpack.c.l.b16 %v1651
    %v1840 = vunpack.c.h.b16 %v1651
    %v1841 = vunpack.c.l.b16 %v1652
    %v1842 = vunpack.c.h.b16 %v1652
    %v1843 = vunpack.c.l.b16 %v1653
    %v1844 = vunpack.c.h.b16 %v1653
    %v1845 = vunpack.c.l.b16 %v1654
    %v1846 = vunpack.c.h.b16 %v1654
    %v1847 = vunpack.c.l.b16 %v1655
    %v1848 = vunpack.c.h.b16 %v1655
    %v1849 = vunpack.c.l.b16 %v1656
    %v1850 = vunpack.c.h.b16 %v1656
    %v1851 = vunpack.c.l.b16 %v1657
    %v1852 = vunpack.c.h.b16 %v1657
    %v1853 = vunpack.c.l.b16 %v1658
    %v1854 = vunpack.c.h.b16 %v1658
    %v1855 = vunpack.c.l.b16 %v1659
    %v1856 = vunpack.c.h.b16 %v1659
    %v1857 = vunpack.c.l.b16 %v1660
    %v1858 = vunpack.c.h.b16 %v1660
    %v1859 = vunpack.c.l.b16 %v1661
    %v1860 = vunpack.c.h.b16 %v1661
    %v1861 = vunpack.c.l.b16 %v1662
    %v1862 = vunpack.c.h.b16 %v1662
    %v1863 = vunpack.c.l.b16 %v1663
    %v1864 = vunpack.c.h.b16 %v1663
    %v1865 = vunpack.c.l.b16 %v1664
    %v1866 = vunpack.c.h.b16 %v1664
    %v1867 = vunpack.c.l.b16 %v1665
    %v1868 = vunpack.c.h.b16 %v1665
    %v1869 = vunpack.c.l.b16 %v1666
    %v1870 = vunpack.c.h.b16 %v1666
    %v1871 = vpack.c.b16 %v1745, %v1743
    %v1872 = vpack.c.b16 %v1746, %v1744
    %v1873 = vpack.c.b16 %v1749, %v1747
    %v1874 = vpack.c.b16 %v1750, %v1748
    %v1875 = vpack.c.b16 %v1753, %v1751
    %v1876 = vpack.c.b16 %v1754, %v1752
    %v1877 = vpack.c.b16 %v1757, %v1755
    %v1878 = vpack.c.b16 %v1758, %v1756
    %v1879 = vpack.c.b16 %v1761, %v1759
    %v1880 = vpack.c.b16 %v1762, %v1760
    %v1881 = vpack.c.b16 %v1765, %v1763
    %v1882 = vpack.c.b16 %v1766, %v1764
    %v1883 = vpack.c.b16 %v1769, %v1767
    %v1884 = vpack.c.b16 %v1770, %v1768
    %v1885 = vpack.c.b16 %v1773, %v1771
    %v1886 = vpack.c.b16 %v1774, %v1772
    %v1887 = vpack.c.b16 %v1777, %v1775
    %v1888 = vpack.c.b16 %v1778, %v1776
    %v1889 = vpack.c.b16 %v1781, %v1779
    %v1890 = vpack.c.b16 %v1782, %v1780
    %v1891 = vpack.c.b16 %v1785, %v1783
    %v1892 = vpack.c.b16 %v1786, %v1784
    %v1893 = vpack.c.b16 %v1789, %v1787
    %v1894 = vpack.c.b16 %v1790, %v1788
    %v1895 = vpack.c.b16 %v1793, %v1791
    %v1896 = vpack.c.b16 %v1794, %v1792
    %v1897 = vpack.c.b16 %v1797, %v1795
    %v1898 = vpack.c.b16 %v1798, %v1796
    %v1899 = vpack.c.b16 %v1801, %v1799
    %v1900 = vpack.c.b16 %v1802, %v1800
    %v1901 = vpack.c.b16 %v1805, %v1803
    %v1902 = vpack.c.b16 %v1806, %v1804
    %v1903 = vpack.c.b16 %v1809, %v1807
    %v1904 = vpack.c.b16 %v1810, %v1808
    %v1905 = vpack.c.b16 %v1813, %v1811
    %v1906 = vpack.c.b16 %v1814, %v1812
    %v1907 = vpack.c.b16 %v1817, %v1815
    %v1908 = vpack.c.b16 %v1818, %v1816
    %v1909 = vpack.c.b16 %v1821, %v1819
    %v1910 = vpack.c.b16 %v1822, %v1820
    %v1911 = vpack.c.b16 %v1825, %v1823
    %v1912 = vpack.c.b16 %v1826, %v1824
    %v1913 = vpack.c.b16 %v1829, %v1827
    %v1914 = vpack.c.b16 %v1830, %v1828
    %v1915 = vpack.c.b16 %v1833, %v1831
    %v1916 = vpack.c.b16 %v1834, %v1832
    %v1917 = vpack.c.b16 %v1837, %v1835
    %v1918 = vpack.c.b16 %v1838, %v1836
    %v1919 = vpack.c.b16 %v1841, %v1839
    %v1920 = vpack.c.b16 %v1842, %v1840
    %v1921 = vpack.c.b16 %v1845, %v1843
    %v1922 = vpack.c.b16 %v1846, %v1844
    %v1923 = vpack.c.b16 %v1849, %v1847
    %v1924 = vpack.c.b16 %v1850, %v1848
    %v1925 = vpack.c.b16 %v1853, %v1851
    %v1926 = vpack.c.b16 %v1854, %v1852
    %v1927 = vpack.c.b16 %v1857, %v1855
    %v1928 = vpack.c.b16 %v1858, %v1856
    %v1929 = vpack.c.b16 %v1861, %v1859
    %v1930 = vpack.c.b16 %v1862, %v1860
    %v1931 = vpack.c.b16 %v1865, %v1863
    %v1932 = vpack.c.b16 %v1866, %v1864
    %v1933 = vpack.c.b16 %v1869, %v1867
    %v1934 = vpack.c.b16 %v1870, %v1868
    %1999 = vmatprep.subr.bf16.mxu0 %v1872
    %2000 = vmatpush1.bf16.msra.mxu0 %v1871
    %2001 = vmatprep.subr.bf16.mxu0 %v1874
    %2002 = vmatpush1.bf16.msra.mxu0 %v1873
    %2003 = vmatprep.subr.bf16.mxu0 %v1876
    %2004 = vmatpush1.bf16.msra.mxu0 %v1875
    %2005 = vmatprep.subr.bf16.mxu0 %v1878
    %2006 = vmatpush1.bf16.msra.mxu0 %v1877
    %2007 = vmatprep.subr.bf16.mxu0 %v1880
    %2008 = vmatpush1.bf16.msra.mxu0 %v1879
    %2009 = vmatprep.subr.bf16.mxu0 %v1882
    %2010 = vmatpush1.bf16.msra.mxu0 %v1881
    %2011 = vmatprep.subr.bf16.mxu0 %v1884
    %2012 = vmatpush1.bf16.msra.mxu0 %v1883
    %2013 = vmatprep.subr.bf16.mxu0 %v1886
    %2014 = vmatpush1.bf16.msra.mxu0 %v1885
    %2015 = vmatprep.subr.bf16.mxu0 %v1888
    %2016 = vmatpush1.bf16.msra.mxu0 %v1887
    %2017 = vmatprep.subr.bf16.mxu0 %v1890
    %2018 = vmatpush1.bf16.msra.mxu0 %v1889
    %2019 = vmatprep.subr.bf16.mxu0 %v1892
    %2020 = vmatpush1.bf16.msra.mxu0 %v1891
    %2021 = vmatprep.subr.bf16.mxu0 %v1894
    %2022 = vmatpush1.bf16.msra.mxu0 %v1893
    %2023 = vmatprep.subr.bf16.mxu0 %v1896
    %2024 = vmatpush1.bf16.msra.mxu0 %v1895
    %2025 = vmatprep.subr.bf16.mxu0 %v1898
    %2026 = vmatpush1.bf16.msra.mxu0 %v1897
    %2027 = vmatprep.subr.bf16.mxu0 %v1900
    %2028 = vmatpush1.bf16.msra.mxu0 %v1899
    %2029 = vmatprep.subr.bf16.mxu0 %v1902
    %2030 = vmatpush1.bf16.msra.mxu0 %v1901
    %2031 = vmatprep.mubr.bf16.mxu0 %v1572
    %2032 = vmatmul.mubr.bf16.gmra.mrb[0].mxu0 %v1571
    %v2033 = vpop.f32.mrb[0].mxu0
    %v2034 = vadd.f32 %v1672, %v2033
    %v2035 = vpop.f32.mrb[0].mxu0
    %v2036 = vadd.f32 %v1676, %v2035
    %v2037 = vpop.f32.mrb[0].mxu0
    %v2038 = vadd.f32 %v1672, %v2037
    %v2039 = vpop.f32.mrb[0].mxu0
    %v2040 = vadd.f32 %v1676, %v2039
    %2041 = vmatprep.mubr.bf16.mxu0 %v1576
    %2042 = vmatmul.mubr.bf16.gmra.mrb[0].mxu0 %v1575
    %v2043 = vpop.f32.mrb[0].mxu0
    %v2044 = vadd.f32 %v1672, %v2043
    %v2045 = vpop.f32.mrb[0].mxu0
    %v2046 = vadd.f32 %v1676, %v2045
    %v2047 = vpop.f32.mrb[0].mxu0
    %v2048 = vadd.f32 %v1672, %v2047
    %v2049 = vpop.f32.mrb[0].mxu0
    %v2050 = vadd.f32 %v1676, %v2049
    %2051 = vmatprep.mubr.bf16.mxu0 %v1580
    %2052 = vmatmul.mubr.bf16.gmra.mrb[0].mxu0 %v1579
    %v2053 = vpop.f32.mrb[0].mxu0
    %v2054 = vadd.f32 %v1672, %v2053
    %v2055 = vpop.f32.mrb[0].mxu0
    %v2056 = vadd.f32 %v1676, %v2055
    %v2057 = vpop.f32.mrb[0].mxu0
    %v2058 = vadd.f32 %v1672, %v2057
    %v2059 = vpop.f32.mrb[0].mxu0
    %v2060 = vadd.f32 %v1676, %v2059
    %2061 = vmatprep.mubr.bf16.mxu0 %v1584
    %2062 = vmatmul.mubr.bf16.gmra.mrb[0].mxu0 %v1583
    %v2063 = vpop.f32.mrb[0].mxu0
    %v2064 = vadd.f32 %v1672, %v2063
    %v2065 = vpop.f32.mrb[0].mxu0
    %v2066 = vadd.f32 %v1676, %v2065
    %v2067 = vpop.f32.mrb[0].mxu0
    %v2068 = vadd.f32 %v1672, %v2067
    %v2069 = vpop.f32.mrb[0].mxu0
    %v2070 = vadd.f32 %v1676, %v2069
    %2071 = vmatprep.mubr.bf16.mxu0 %v1588
    %2072 = vmatmul.mubr.bf16.gmra.mrb[0].mxu0 %v1587
    %v2073 = vpop.f32.mrb[0].mxu0
    %v2074 = vadd.f32 %v1672, %v2073
    %v2075 = vpop.f32.mrb[0].mxu0
    %v2076 = vadd.f32 %v1676, %v2075
    %v2077 = vpop.f32.mrb[0].mxu0
    %v2078 = vadd.f32 %v1672, %v2077
    %v2079 = vpop.f32.mrb[0].mxu0
    %v2080 = vadd.f32 %v1676, %v2079
    %2081 = vmatprep.mubr.bf16.mxu0 %v1592
    %2082 = vmatmul.mubr.bf16.gmra.mrb[0].mxu0 %v1591
    %v2083 = vpop.f32.mrb[0].mxu0
    %v2084 = vadd.f32 %v1672, %v2083
    %v2085 = vpop.f32.mrb[0].mxu0
    %v2086 = vadd.f32 %v1676, %v2085
    %v2087 = vpop.f32.mrb[0].mxu0
    %v2088 = vadd.f32 %v1672, %v2087
    %v2089 = vpop.f32.mrb[0].mxu0
    %v2090 = vadd.f32 %v1676, %v2089
    %2091 = vmatprep.mubr.bf16.mxu0 %v1596
    %2092 = vmatmul.mubr.bf16.gmra.mrb[0].mxu0 %v1595
    %v2093 = vpop.f32.mrb[0].mxu0
    %v2094 = vadd.f32 %v1672, %v2093
    %v2095 = vpop.f32.mrb[0].mxu0
    %v2096 = vadd.f32 %v1676, %v2095
    %v2097 = vpop.f32.mrb[0].mxu0
    %v2098 = vadd.f32 %v1672, %v2097
    %v2099 = vpop.f32.mrb[0].mxu0
    %v2100 = vadd.f32 %v1676, %v2099
    %2101 = vmatprep.mubr.bf16.mxu0 %v1600
    %2102 = vmatmul.mubr.bf16.gmra.mrb[0].mxu0 %v1599
    %v2103 = vpop.f32.mrb[0].mxu0
    %v2104 = vadd.f32 %v1672, %v2103
    %v2105 = vpop.f32.mrb[0].mxu0
    %v2106 = vadd.f32 %v1676, %v2105
    %v2107 = vpop.f32.mrb[0].mxu0
    %v2108 = vadd.f32 %v1672, %v2107
    %v2109 = vpop.f32.mrb[0].mxu0
    %v2110 = vadd.f32 %v1676, %v2109
    %2111 = vdwg.mxu0
    %2112 = vmatprep.subr.bf16.mxu0 %v1904
    %2113 = vmatpush1.bf16.msra.mxu0 %v1903
    %2114 = vmatprep.subr.bf16.mxu0 %v1906
    %2115 = vmatpush1.bf16.msra.mxu0 %v1905
    %2116 = vmatprep.subr.bf16.mxu0 %v1908
    %2117 = vmatpush1.bf16.msra.mxu0 %v1907
    %2118 = vmatprep.subr.bf16.mxu0 %v1910
    %2119 = vmatpush1.bf16.msra.mxu0 %v1909
    %2120 = vmatprep.subr.bf16.mxu0 %v1912
    %2121 = vmatpush1.bf16.msra.mxu0 %v1911
    %2122 = vmatprep.subr.bf16.mxu0 %v1914
    %2123 = vmatpush1.bf16.msra.mxu0 %v1913
    %2124 = vmatprep.subr.bf16.mxu0 %v1916
    %2125 = vmatpush1.bf16.msra.mxu0 %v1915
    %2126 = vmatprep.subr.bf16.mxu0 %v1918
    %2127 = vmatpush1.bf16.msra.mxu0 %v1917
    %2128 = vmatprep.subr.bf16.mxu0 %v1920
    %2129 = vmatpush1.bf16.msra.mxu0 %v1919
    %2130 = vmatprep.subr.bf16.mxu0 %v1922
    %2131 = vmatpush1.bf16.msra.mxu0 %v1921
    %2132 = vmatprep.subr.bf16.mxu0 %v1924
    %2133 = vmatpush1.bf16.msra.mxu0 %v1923
    %2134 = vmatprep.subr.bf16.mxu0 %v1926
    %2135 = vmatpush1.bf16.msra.mxu0 %v1925
    %2136 = vmatprep.subr.bf16.mxu0 %v1928
    %2137 = vmatpush1.bf16.msra.mxu0 %v1927
    %2138 = vmatprep.subr.bf16.mxu0 %v1930
    %2139 = vmatpush1.bf16.msra.mxu0 %v1929
    %2140 = vmatprep.subr.bf16.mxu0 %v1932
    %2141 = vmatpush1.bf16.msra.mxu0 %v1931
    %2142 = vmatprep.subr.bf16.mxu0 %v1934
    %2143 = vmatpush1.bf16.msra.mxu0 %v1933
    %2144 = vmatprep.mubr.bf16.mxu0 %v1574
    %2145 = vmatmul.mubr.bf16.gmra.mrb[0].mxu0 %v1573
    %v2146 = vpop.f32.mrb[0].mxu0
    %v2147 = vadd.f32 %v2034, %v2146
    %v2148 = vpop.f32.mrb[0].mxu0
    %v2149 = vadd.f32 %v2036, %v2148
    %v2150 = vpop.f32.mrb[0].mxu0
    %v2151 = vadd.f32 %v2038, %v2150
    %v2152 = vpop.f32.mrb[0].mxu0
    %v2153 = vadd.f32 %v2040, %v2152
    %2154 = vmatprep.mubr.bf16.mxu0 %v1578
    %2155 = vmatmul.mubr.bf16.gmra.mrb[0].mxu0 %v1577
    %v2156 = vpop.f32.mrb[0].mxu0
    %v2157 = vadd.f32 %v2044, %v2156
    %v2158 = vpop.f32.mrb[0].mxu0
    %v2159 = vadd.f32 %v2046, %v2158
    %v2160 = vpop.f32.mrb[0].mxu0
    %v2161 = vadd.f32 %v2048, %v2160
    %v2162 = vpop.f32.mrb[0].mxu0
    %v2163 = vadd.f32 %v2050, %v2162
    %2164 = vmatprep.mubr.bf16.mxu0 %v1582
    %2165 = vmatmul.mubr.bf16.gmra.mrb[0].mxu0 %v1581
    %v2166 = vpop.f32.mrb[0].mxu0
    %v2167 = vadd.f32 %v2054, %v2166
    %v2168 = vpop.f32.mrb[0].mxu0
    %v2169 = vadd.f32 %v2056, %v2168
    %v2170 = vpop.f32.mrb[0].mxu0
    %v2171 = vadd.f32 %v2058, %v2170
    %v2172 = vpop.f32.mrb[0].mxu0
    %v2173 = vadd.f32 %v2060, %v2172
    %2174 = vmatprep.mubr.bf16.mxu0 %v1586
    %2175 = vmatmul.mubr.bf16.gmra.mrb[0].mxu0 %v1585
    %v2176 = vpop.f32.mrb[0].mxu0
    %v2177 = vadd.f32 %v2064, %v2176
    %v2178 = vpop.f32.mrb[0].mxu0
    %v2179 = vadd.f32 %v2066, %v2178
    %v2180 = vpop.f32.mrb[0].mxu0
    %v2181 = vadd.f32 %v2068, %v2180
    %v2182 = vpop.f32.mrb[0].mxu0
    %v2183 = vadd.f32 %v2070, %v2182
    %2184 = vmatprep.mubr.bf16.mxu0 %v1590
    %2185 = vmatmul.mubr.bf16.gmra.mrb[0].mxu0 %v1589
    %v2186 = vpop.f32.mrb[0].mxu0
    %v2187 = vadd.f32 %v2074, %v2186
    %v2188 = vpop.f32.mrb[0].mxu0
    %v2189 = vadd.f32 %v2076, %v2188
    %v2190 = vpop.f32.mrb[0].mxu0
    %v2191 = vadd.f32 %v2078, %v2190
    %v2192 = vpop.f32.mrb[0].mxu0
    %v2193 = vadd.f32 %v2080, %v2192
    %2194 = vmatprep.mubr.bf16.mxu0 %v1594
    %2195 = vmatmul.mubr.bf16.gmra.mrb[0].mxu0 %v1593
    %v2196 = vpop.f32.mrb[0].mxu0
    %v2197 = vadd.f32 %v2084, %v2196
    %v2198 = vpop.f32.mrb[0].mxu0
    %v2199 = vadd.f32 %v2086, %v2198
    %v2200 = vpop.f32.mrb[0].mxu0
    %v2201 = vadd.f32 %v2088, %v2200
    %v2202 = vpop.f32.mrb[0].mxu0
    %v2203 = vadd.f32 %v2090, %v2202
    %2204 = vmatprep.mubr.bf16.mxu0 %v1598
    %2205 = vmatmul.mubr.bf16.gmra.mrb[0].mxu0 %v1597
    %v2206 = vpop.f32.mrb[0].mxu0
    %v2207 = vadd.f32 %v2094, %v2206
    %v2208 = vpop.f32.mrb[0].mxu0
    %v2209 = vadd.f32 %v2096, %v2208
    %v2210 = vpop.f32.mrb[0].mxu0
    %v2211 = vadd.f32 %v2098, %v2210
    %v2212 = vpop.f32.mrb[0].mxu0
    %v2213 = vadd.f32 %v2100, %v2212
    %2214 = vmatprep.mubr.bf16.mxu0 %v1602
    %2215 = vmatmul.mubr.bf16.gmra.mrb[0].mxu0 %v1601
    %v2216 = vpop.f32.mrb[0].mxu0
    %v2217 = vadd.f32 %v2104, %v2216
    %v2218 = vpop.f32.mrb[0].mxu0
    %v2219 = vadd.f32 %v2106, %v2218
    %v2220 = vpop.f32.mrb[0].mxu0
    %v2221 = vadd.f32 %v2108, %v2220
    %v2222 = vpop.f32.mrb[0].mxu0
    %v2223 = vadd.f32 %v2110, %v2222
    %2224 = vdwg.mxu0
    %vm2225 = vcmp.gt.f32.partialorder %v2147, 0.0
    %vm2226 = vcmp.gt.f32.partialorder %v2149, 0.0
    %vm2227 = vcmp.gt.f32.partialorder %v2151, 0.0
    %vm2228 = vcmp.gt.f32.partialorder %v2153, 0.0
    %vm2229 = vcmp.gt.f32.partialorder %v2157, 0.0
    %vm2230 = vcmp.gt.f32.partialorder %v2159, 0.0
    %vm2231 = vcmp.gt.f32.partialorder %v2161, 0.0
    %vm2232 = vcmp.gt.f32.partialorder %v2163, 0.0
    %vm2233 = vcmp.gt.f32.partialorder %v2167, 0.0
    %vm2234 = vcmp.gt.f32.partialorder %v2169, 0.0
    %vm2235 = vcmp.gt.f32.partialorder %v2171, 0.0
    %vm2236 = vcmp.gt.f32.partialorder %v2173, 0.0
    %vm2237 = vcmp.gt.f32.partialorder %v2177, 0.0
    %vm2238 = vcmp.gt.f32.partialorder %v2179, 0.0
    %vm2239 = vcmp.gt.f32.partialorder %v2181, 0.0
    %vm2240 = vcmp.gt.f32.partialorder %v2183, 0.0
    %vm2241 = vcmp.gt.f32.partialorder %v2187, 0.0
    %vm2242 = vcmp.gt.f32.partialorder %v2189, 0.0
    %vm2243 = vcmp.gt.f32.partialorder %v2191, 0.0
    %vm2244 = vcmp.gt.f32.partialorder %v2193, 0.0
    %vm2245 = vcmp.gt.f32.partialorder %v2197, 0.0
    %vm2246 = vcmp.gt.f32.partialorder %v2199, 0.0
    %vm2247 = vcmp.gt.f32.partialorder %v2201, 0.0
    %vm2248 = vcmp.gt.f32.partialorder %v2203, 0.0
    %vm2249 = vcmp.gt.f32.partialorder %v2207, 0.0
    %vm2250 = vcmp.gt.f32.partialorder %v2209, 0.0
    %vm2251 = vcmp.gt.f32.partialorder %v2211, 0.0
    %vm2252 = vcmp.gt.f32.partialorder %v2213, 0.0
    %vm2253 = vcmp.gt.f32.partialorder %v2217, 0.0
    %vm2254 = vcmp.gt.f32.partialorder %v2219, 0.0
    %vm2255 = vcmp.gt.f32.partialorder %v2221, 0.0
    %vm2256 = vcmp.gt.f32.partialorder %v2223, 0.0
    %v2257 = vmul.f32 %v2147, 0.2
    %v2258 = vmul.f32 %v2149, 0.2
    %v2259 = vmul.f32 %v2151, 0.2
    %v2260 = vmul.f32 %v2153, 0.2
    %v2261 = vmul.f32 %v2157, 0.2
    %v2262 = vmul.f32 %v2159, 0.2
    %v2263 = vmul.f32 %v2161, 0.2
    %v2264 = vmul.f32 %v2163, 0.2
    %v2265 = vmul.f32 %v2167, 0.2
    %v2266 = vmul.f32 %v2169, 0.2
    %v2267 = vmul.f32 %v2171, 0.2
    %v2268 = vmul.f32 %v2173, 0.2
    %v2269 = vmul.f32 %v2177, 0.2
    %v2270 = vmul.f32 %v2179, 0.2
    %v2271 = vmul.f32 %v2181, 0.2
    %v2272 = vmul.f32 %v2183, 0.2
    %v2273 = vmul.f32 %v2187, 0.2
    %v2274 = vmul.f32 %v2189, 0.2
    %v2275 = vmul.f32 %v2191, 0.2
    %v2276 = vmul.f32 %v2193, 0.2
    %v2277 = vmul.f32 %v2197, 0.2
    %v2278 = vmul.f32 %v2199, 0.2
    %v2279 = vmul.f32 %v2201, 0.2
    %v2280 = vmul.f32 %v2203, 0.2
    %v2281 = vmul.f32 %v2207, 0.2
    %v2282 = vmul.f32 %v2209, 0.2
    %v2283 = vmul.f32 %v2211, 0.2
    %v2284 = vmul.f32 %v2213, 0.2
    %v2285 = vmul.f32 %v2217, 0.2
    %v2286 = vmul.f32 %v2219, 0.2
    %v2287 = vmul.f32 %v2221, 0.2
    %v2288 = vmul.f32 %v2223, 0.2
    %v2289 = vsel %vm2225, %v2147, %v2257
    %v2290 = vsel %vm2226, %v2149, %v2258
    %v2291 = vsel %vm2227, %v2151, %v2259
    %v2292 = vsel %vm2228, %v2153, %v2260
    %v2293 = vsel %vm2229, %v2157, %v2261
    %v2294 = vsel %vm2230, %v2159, %v2262
    %v2295 = vsel %vm2231, %v2161, %v2263
    %v2296 = vsel %vm2232, %v2163, %v2264
    %v2297 = vsel %vm2233, %v2167, %v2265
    %v2298 = vsel %vm2234, %v2169, %v2266
    %v2299 = vsel %vm2235, %v2171, %v2267
    %v2300 = vsel %vm2236, %v2173, %v2268
    %v2301 = vsel %vm2237, %v2177, %v2269
    %v2302 = vsel %vm2238, %v2179, %v2270
    %v2303 = vsel %vm2239, %v2181, %v2271
    %v2304 = vsel %vm2240, %v2183, %v2272
    %v2305 = vsel %vm2241, %v2187, %v2273
    %v2306 = vsel %vm2242, %v2189, %v2274
    %v2307 = vsel %vm2243, %v2191, %v2275
    %v2308 = vsel %vm2244, %v2193, %v2276
    %v2309 = vsel %vm2245, %v2197, %v2277
    %v2310 = vsel %vm2246, %v2199, %v2278
    %v2311 = vsel %vm2247, %v2201, %v2279
    %v2312 = vsel %vm2248, %v2203, %v2280
    %v2313 = vsel %vm2249, %v2207, %v2281
    %v2314 = vsel %vm2250, %v2209, %v2282
    %v2315 = vsel %vm2251, %v2211, %v2283
    %v2316 = vsel %vm2252, %v2213, %v2284
    %v2317 = vsel %vm2253, %v2217, %v2285
    %v2318 = vsel %vm2254, %v2219, %v2286
    %v2319 = vsel %vm2255, %v2221, %v2287
    %v2320 = vsel %vm2256, %v2223, %v2288
    %v2321 = vpack.c.bf16 %v2291, %v2289
    %v2322 = vpack.c.bf16 %v2292, %v2290
    %v2323 = vpack.c.bf16 %v2295, %v2293
    %v2324 = vpack.c.bf16 %v2296, %v2294
    %v2325 = vpack.c.bf16 %v2299, %v2297
    %v2326 = vpack.c.bf16 %v2300, %v2298
    %v2327 = vpack.c.bf16 %v2303, %v2301
    %v2328 = vpack.c.bf16 %v2304, %v2302
    %v2329 = vpack.c.bf16 %v2307, %v2305
    %v2330 = vpack.c.bf16 %v2308, %v2306
    %v2331 = vpack.c.bf16 %v2311, %v2309
    %v2332 = vpack.c.bf16 %v2312, %v2310
    %v2333 = vpack.c.bf16 %v2315, %v2313
    %v2334 = vpack.c.bf16 %v2316, %v2314
    %v2335 = vpack.c.bf16 %v2319, %v2317
    %v2336 = vpack.c.bf16 %v2320, %v2318
    %v2337 = vld [vmem:[%s5] sm:$0xf]
    %v2338 = vld [vmem:[%s5 + $0x4] sm:$0xf]
    %v2339 = vld [vmem:[%s5 + $0x8] sm:$0xf]
    %v2340 = vld [vmem:[%s5 + $0xc] sm:$0xf]
    %v2341 = vld [vmem:[%s5 + $0x10] sm:$0xf]
    %v2342 = vld [vmem:[%s5 + $0x14] sm:$0xf]
    %v2343 = vld [vmem:[%s5 + $0x18] sm:$0xf]
    %v2344 = vld [vmem:[%s5 + $0x1c] sm:$0xf]
    %v2345 = vld [vmem:[%s5 + $0x20] sm:$0xf]
    %v2346 = vld [vmem:[%s5 + $0x24] sm:$0xf]
    %v2347 = vld [vmem:[%s5 + $0x28] sm:$0xf]
    %v2348 = vld [vmem:[%s5 + $0x2c] sm:$0xf]
    %v2349 = vld [vmem:[%s5 + $0x30] sm:$0xf]
    %v2350 = vld [vmem:[%s5 + $0x34] sm:$0xf]
    %v2351 = vld [vmem:[%s5 + $0x38] sm:$0xf]
    %v2352 = vld [vmem:[%s5 + $0x3c] sm:$0xf]
    %v2353 = vld [vmem:[%s5 + $0x40] sm:$0xf]
    %v2354 = vld [vmem:[%s5 + $0x44] sm:$0xf]
    %v2355 = vld [vmem:[%s5 + $0x48] sm:$0xf]
    %v2356 = vld [vmem:[%s5 + $0x4c] sm:$0xf]
    %v2357 = vld [vmem:[%s5 + $0x50] sm:$0xf]
    %v2358 = vld [vmem:[%s5 + $0x54] sm:$0xf]
    %v2359 = vld [vmem:[%s5 + $0x58] sm:$0xf]
    %v2360 = vld [vmem:[%s5 + $0x5c] sm:$0xf]
    %v2361 = vld [vmem:[%s5 + $0x60] sm:$0xf]
    %v2362 = vld [vmem:[%s5 + $0x64] sm:$0xf]
    %v2363 = vld [vmem:[%s5 + $0x68] sm:$0xf]
    %v2364 = vld [vmem:[%s5 + $0x6c] sm:$0xf]
    %v2365 = vld [vmem:[%s5 + $0x70] sm:$0xf]
    %v2366 = vld [vmem:[%s5 + $0x74] sm:$0xf]
    %v2367 = vld [vmem:[%s5 + $0x78] sm:$0xf]
    %v2368 = vld [vmem:[%s5 + $0x7c] sm:$0xf]
    %v2369 = vld [vmem:[%s6] sm:$0x1]
    %v2371 = vlaneseq
    %v2372 = vshrl.u32 %v2371, 7
    %v2373 = vsub.s32 0, %v2372
    %v2374 = vrot.slane %v2369, %v2373
    %v2408 = vunpack.c.l.b16 %v2337
    %v2409 = vunpack.c.l.b16 %v2338
    %v2410 = vunpack.c.l.b16 %v2339
    %v2411 = vunpack.c.l.b16 %v2340
    %v2412 = vunpack.c.l.b16 %v2341
    %v2413 = vunpack.c.l.b16 %v2342
    %v2414 = vunpack.c.l.b16 %v2343
    %v2415 = vunpack.c.l.b16 %v2344
    %v2416 = vunpack.c.l.b16 %v2345
    %v2417 = vunpack.c.l.b16 %v2346
    %v2418 = vunpack.c.l.b16 %v2347
    %v2419 = vunpack.c.l.b16 %v2348
    %v2420 = vunpack.c.l.b16 %v2349
    %v2421 = vunpack.c.l.b16 %v2350
    %v2422 = vunpack.c.l.b16 %v2351
    %v2423 = vunpack.c.l.b16 %v2352
    %v2424 = vunpack.c.l.b16 %v2353
    %v2425 = vunpack.c.l.b16 %v2354
    %v2426 = vunpack.c.l.b16 %v2355
    %v2427 = vunpack.c.l.b16 %v2356
    %v2428 = vunpack.c.l.b16 %v2357
    %v2429 = vunpack.c.l.b16 %v2358
    %v2430 = vunpack.c.l.b16 %v2359
    %v2431 = vunpack.c.l.b16 %v2360
    %v2432 = vunpack.c.l.b16 %v2361
    %v2433 = vunpack.c.l.b16 %v2362
    %v2434 = vunpack.c.l.b16 %v2363
    %v2435 = vunpack.c.l.b16 %v2364
    %v2436 = vunpack.c.l.b16 %v2365
    %v2437 = vunpack.c.l.b16 %v2366
    %v2438 = vunpack.c.l.b16 %v2367
    %v2439 = vunpack.c.l.b16 %v2368
    %v2440 = vpack.c.b16 %v2409, %v2408
    %v2441 = vpack.c.b16 %v2411, %v2410
    %v2442 = vpack.c.b16 %v2413, %v2412
    %v2443 = vpack.c.b16 %v2415, %v2414
    %v2444 = vpack.c.b16 %v2417, %v2416
    %v2445 = vpack.c.b16 %v2419, %v2418
    %v2446 = vpack.c.b16 %v2421, %v2420
    %v2447 = vpack.c.b16 %v2423, %v2422
    %v2448 = vpack.c.b16 %v2425, %v2424
    %v2449 = vpack.c.b16 %v2427, %v2426
    %v2450 = vpack.c.b16 %v2429, %v2428
    %v2451 = vpack.c.b16 %v2431, %v2430
    %v2452 = vpack.c.b16 %v2433, %v2432
    %v2453 = vpack.c.b16 %v2435, %v2434
    %v2454 = vpack.c.b16 %v2437, %v2436
    %v2455 = vpack.c.b16 %v2439, %v2438
    %2472 = vmatprep.subr.bf16.mxu0 0
    %2473 = vmatpush1.bf16.msra.mxu0 %v2440
    %2474 = vmatprep.subr.bf16.mxu0 0
    %2475 = vmatpush1.bf16.msra.mxu0 %v2441
    %2476 = vmatprep.subr.bf16.mxu0 0
    %2477 = vmatpush1.bf16.msra.mxu0 %v2442
    %2478 = vmatprep.subr.bf16.mxu0 0
    %2479 = vmatpush1.bf16.msra.mxu0 %v2443
    %2480 = vmatprep.subr.bf16.mxu0 0
    %2481 = vmatpush1.bf16.msra.mxu0 %v2444
    %2482 = vmatprep.subr.bf16.mxu0 0
    %2483 = vmatpush1.bf16.msra.mxu0 %v2445
    %2484 = vmatprep.subr.bf16.mxu0 0
    %2485 = vmatpush1.bf16.msra.mxu0 %v2446
    %2486 = vmatprep.subr.bf16.mxu0 0
    %2487 = vmatpush1.bf16.msra.mxu0 %v2447
    %2488 = vmatprep.subr.bf16.mxu0 0
    %2489 = vmatpush1.bf16.msra.mxu0 %v2448
    %2490 = vmatprep.subr.bf16.mxu0 0
    %2491 = vmatpush1.bf16.msra.mxu0 %v2449
    %2492 = vmatprep.subr.bf16.mxu0 0
    %2493 = vmatpush1.bf16.msra.mxu0 %v2450
    %2494 = vmatprep.subr.bf16.mxu0 0
    %2495 = vmatpush1.bf16.msra.mxu0 %v2451
    %2496 = vmatprep.subr.bf16.mxu0 0
    %2497 = vmatpush1.bf16.msra.mxu0 %v2452
    %2498 = vmatprep.subr.bf16.mxu0 0
    %2499 = vmatpush1.bf16.msra.mxu0 %v2453
    %2500 = vmatprep.subr.bf16.mxu0 0
    %2501 = vmatpush1.bf16.msra.mxu0 %v2454
    %2502 = vmatprep.subr.bf16.mxu0 0
    %2503 = vmatpush1.bf16.msra.mxu0 %v2455
    %2504 = vmatprep.mubr.bf16.mxu0 %v2322
    %2505 = vmatmul.mubr.bf16.gmra.mrb[0].mxu0 %v2321
    %v2506 = vpop.f32.mrb[0].mxu0
    %v2507 = vadd.f32 %v2374, %v2506
    %v2508 = vpop.f32.mrb[0].mxu0
    %v2509 = vpop.f32.mrb[0].mxu0
    %v2510 = vadd.f32 %v2374, %v2509
    %v2511 = vpop.f32.mrb[0].mxu0
    %2512 = vmatprep.mubr.bf16.mxu0 %v2324
    %2513 = vmatmul.mubr.bf16.gmra.mrb[0].mxu0 %v2323
    %v2514 = vpop.f32.mrb[0].mxu0
    %v2515 = vadd.f32 %v2374, %v2514
    %v2516 = vpop.f32.mrb[0].mxu0
    %v2517 = vpop.f32.mrb[0].mxu0
    %v2518 = vadd.f32 %v2374, %v2517
    %v2519 = vpop.f32.mrb[0].mxu0
    %2520 = vmatprep.mubr.bf16.mxu0 %v2326
    %2521 = vmatmul.mubr.bf16.gmra.mrb[0].mxu0 %v2325
    %v2522 = vpop.f32.mrb[0].mxu0
    %v2523 = vadd.f32 %v2374, %v2522
    %v2524 = vpop.f32.mrb[0].mxu0
    %v2525 = vpop.f32.mrb[0].mxu0
    %v2526 = vadd.f32 %v2374, %v2525
    %v2527 = vpop.f32.mrb[0].mxu0
    %2528 = vmatprep.mubr.bf16.mxu0 %v2328
    %2529 = vmatmul.mubr.bf16.gmra.mrb[0].mxu0 %v2327
    %v2530 = vpop.f32.mrb[0].mxu0
    %v2531 = vadd.f32 %v2374, %v2530
    %v2532 = vpop.f32.mrb[0].mxu0
    %v2533 = vpop.f32.mrb[0].mxu0
    %v2534 = vadd.f32 %v2374, %v2533
    %v2535 = vpop.f32.mrb[0].mxu0
    %2536 = vmatprep.mubr.bf16.mxu0 %v2330
    %2537 = vmatmul.mubr.bf16.gmra.mrb[0].mxu0 %v2329
    %v2538 = vpop.f32.mrb[0].mxu0
    %v2539 = vadd.f32 %v2374, %v2538
    %v2540 = vpop.f32.mrb[0].mxu0
    %v2541 = vpop.f32.mrb[0].mxu0
    %v2542 = vadd.f32 %v2374, %v2541
    %v2543 = vpop.f32.mrb[0].mxu0
    %2544 = vmatprep.mubr.bf16.mxu0 %v2332
    %2545 = vmatmul.mubr.bf16.gmra.mrb[0].mxu0 %v2331
    %v2546 = vpop.f32.mrb[0].mxu0
    %v2547 = vadd.f32 %v2374, %v2546
    %v2548 = vpop.f32.mrb[0].mxu0
    %v2549 = vpop.f32.mrb[0].mxu0
    %v2550 = vadd.f32 %v2374, %v2549
    %v2551 = vpop.f32.mrb[0].mxu0
    %2552 = vmatprep.mubr.bf16.mxu0 %v2334
    %2553 = vmatmul.mubr.bf16.gmra.mrb[0].mxu0 %v2333
    %v2554 = vpop.f32.mrb[0].mxu0
    %v2555 = vadd.f32 %v2374, %v2554
    %v2556 = vpop.f32.mrb[0].mxu0
    %v2557 = vpop.f32.mrb[0].mxu0
    %v2558 = vadd.f32 %v2374, %v2557
    %v2559 = vpop.f32.mrb[0].mxu0
    %2560 = vmatprep.mubr.bf16.mxu0 %v2336
    %2561 = vmatmul.mubr.bf16.gmra.mrb[0].mxu0 %v2335
    %v2562 = vpop.f32.mrb[0].mxu0
    %v2563 = vadd.f32 %v2374, %v2562
    %v2564 = vpop.f32.mrb[0].mxu0
    %v2565 = vpop.f32.mrb[0].mxu0
    %v2566 = vadd.f32 %v2374, %v2565
    %v2567 = vpop.f32.mrb[0].mxu0
    %2568 = vdwg.mxu0
    %v2569 = vxor.u32 %v2507, 2147483648
    %v2570 = vxor.u32 %v2510, 2147483648
    %v2571 = vxor.u32 %v2515, 2147483648
    %v2572 = vxor.u32 %v2518, 2147483648
    %v2573 = vxor.u32 %v2523, 2147483648
    %v2574 = vxor.u32 %v2526, 2147483648
    %v2575 = vxor.u32 %v2531, 2147483648
    %v2576 = vxor.u32 %v2534, 2147483648
    %v2577 = vxor.u32 %v2539, 2147483648
    %v2578 = vxor.u32 %v2542, 2147483648
    %v2579 = vxor.u32 %v2547, 2147483648
    %v2580 = vxor.u32 %v2550, 2147483648
    %v2581 = vxor.u32 %v2555, 2147483648
    %v2582 = vxor.u32 %v2558, 2147483648
    %v2583 = vxor.u32 %v2563, 2147483648
    %v2584 = vxor.u32 %v2566, 2147483648
    %v2585 = vmul.f32 %v2569, 1.442695
    %v2586 = vpow.pop %v2585
    %v2587 = vmul.f32 %v2570, 1.442695
    %v2588 = vpow.pop %v2587
    %v2589 = vmul.f32 %v2571, 1.442695
    %v2590 = vpow.pop %v2589
    %v2591 = vmul.f32 %v2572, 1.442695
    %v2592 = vpow.pop %v2591
    %v2593 = vmul.f32 %v2573, 1.442695
    %v2594 = vpow.pop %v2593
    %v2595 = vmul.f32 %v2574, 1.442695
    %v2596 = vpow.pop %v2595
    %v2597 = vmul.f32 %v2575, 1.442695
    %v2598 = vpow.pop %v2597
    %v2599 = vmul.f32 %v2576, 1.442695
    %v2600 = vpow.pop %v2599
    %v2601 = vmul.f32 %v2577, 1.442695
    %v2602 = vpow.pop %v2601
    %v2603 = vmul.f32 %v2578, 1.442695
    %v2604 = vpow.pop %v2603
    %v2605 = vmul.f32 %v2579, 1.442695
    %v2606 = vpow.pop %v2605
    %v2607 = vmul.f32 %v2580, 1.442695
    %v2608 = vpow.pop %v2607
    %v2609 = vmul.f32 %v2581, 1.442695
    %v2610 = vpow.pop %v2609
    %v2611 = vmul.f32 %v2582, 1.442695
    %v2612 = vpow.pop %v2611
    %v2613 = vmul.f32 %v2583, 1.442695
    %v2614 = vpow.pop %v2613
    %v2615 = vmul.f32 %v2584, 1.442695
    %v2616 = vpow.pop %v2615
    %v2617 = vadd.f32 %v2586, 1.0
    %v2618 = vadd.f32 %v2588, 1.0
    %v2619 = vadd.f32 %v2590, 1.0
    %v2620 = vadd.f32 %v2592, 1.0
    %v2621 = vadd.f32 %v2594, 1.0
    %v2622 = vadd.f32 %v2596, 1.0
    %v2623 = vadd.f32 %v2598, 1.0
    %v2624 = vadd.f32 %v2600, 1.0
    %v2625 = vadd.f32 %v2602, 1.0
    %v2626 = vadd.f32 %v2604, 1.0
    %v2627 = vadd.f32 %v2606, 1.0
    %v2628 = vadd.f32 %v2608, 1.0
    %v2629 = vadd.f32 %v2610, 1.0
    %v2630 = vadd.f32 %v2612, 1.0
    %v2631 = vadd.f32 %v2614, 1.0
    %v2632 = vadd.f32 %v2616, 1.0
    %v2633 = vrcp.pop %v2617
    %v2634 = vmul.f32 1.0, %v2633
    %v2635 = vrcp.pop %v2618
    %v2636 = vmul.f32 1.0, %v2635
    %v2637 = vrcp.pop %v2619
    %v2638 = vmul.f32 1.0, %v2637
    %v2639 = vrcp.pop %v2620
    %v2640 = vmul.f32 1.0, %v2639
    %v2641 = vrcp.pop %v2621
    %v2642 = vmul.f32 1.0, %v2641
    %v2643 = vrcp.pop %v2622
    %v2644 = vmul.f32 1.0, %v2643
    %v2645 = vrcp.pop %v2623
    %v2646 = vmul.f32 1.0, %v2645
    %v2647 = vrcp.pop %v2624
    %v2648 = vmul.f32 1.0, %v2647
    %v2649 = vrcp.pop %v2625
    %v2650 = vmul.f32 1.0, %v2649
    %v2651 = vrcp.pop %v2626
    %v2652 = vmul.f32 1.0, %v2651
    %v2653 = vrcp.pop %v2627
    %v2654 = vmul.f32 1.0, %v2653
    %v2655 = vrcp.pop %v2628
    %v2656 = vmul.f32 1.0, %v2655
    %v2657 = vrcp.pop %v2629
    %v2658 = vmul.f32 1.0, %v2657
    %v2659 = vrcp.pop %v2630
    %v2660 = vmul.f32 1.0, %v2659
    %v2661 = vrcp.pop %v2631
    %v2662 = vmul.f32 1.0, %v2661
    %v2663 = vrcp.pop %v2632
    %v2664 = vmul.f32 1.0, %v2663
    %2681 = vset.pattern.permute.xlu0 0
    %2682 = vperm.xlu0 %2681, %v2634
    %v2683 = vpop.permute.xlu0 %2682
    %2684 = vset.pattern.permute.xlu0 0
    %2685 = vperm.xlu0 %2684, %v2636
    %v2686 = vpop.permute.xlu0 %2685
    %2687 = vset.pattern.permute.xlu0 0
    %2688 = vperm.xlu0 %2687, %v2638
    %v2689 = vpop.permute.xlu0 %2688
    %2690 = vset.pattern.permute.xlu0 0
    %2691 = vperm.xlu0 %2690, %v2640
    %v2692 = vpop.permute.xlu0 %2691
    %2693 = vset.pattern.permute.xlu0 0
    %2694 = vperm.xlu0 %2693, %v2642
    %v2695 = vpop.permute.xlu0 %2694
    %2696 = vset.pattern.permute.xlu0 0
    %2697 = vperm.xlu0 %2696, %v2644
    %v2698 = vpop.permute.xlu0 %2697
    %2699 = vset.pattern.permute.xlu0 0
    %2700 = vperm.xlu0 %2699, %v2646
    %v2701 = vpop.permute.xlu0 %2700
    %2702 = vset.pattern.permute.xlu0 0
    %2703 = vperm.xlu0 %2702, %v2648
    %v2704 = vpop.permute.xlu0 %2703
    %2705 = vset.pattern.permute.xlu0 0
    %2706 = vperm.xlu0 %2705, %v2650
    %v2707 = vpop.permute.xlu0 %2706
    %2708 = vset.pattern.permute.xlu0 0
    %2709 = vperm.xlu0 %2708, %v2652
    %v2710 = vpop.permute.xlu0 %2709
    %2711 = vset.pattern.permute.xlu0 0
    %2712 = vperm.xlu0 %2711, %v2654
    %v2713 = vpop.permute.xlu0 %2712
    %2714 = vset.pattern.permute.xlu0 0
    %2715 = vperm.xlu0 %2714, %v2656
    %v2716 = vpop.permute.xlu0 %2715
    %2717 = vset.pattern.permute.xlu0 0
    %2718 = vperm.xlu0 %2717, %v2658
    %v2719 = vpop.permute.xlu0 %2718
    %2720 = vset.pattern.permute.xlu0 0
    %2721 = vperm.xlu0 %2720, %v2660
    %v2722 = vpop.permute.xlu0 %2721
    %2723 = vset.pattern.permute.xlu0 0
    %2724 = vperm.xlu0 %2723, %v2662
    %v2725 = vpop.permute.xlu0 %2724
    %2726 = vset.pattern.permute.xlu0 0
    %2727 = vperm.xlu0 %2726, %v2664
    %v2728 = vpop.permute.xlu0 %2727
    %v2729 = vlaneseq
    %v2730 = vand.u32 %v2729, 127
    %v2731 = vlaneseq
    %v2732 = vshrl.u32 %v2731, 7
    %v2733 = vsub.s32 %v2730, %v2732
    %v2734 = vrot.slane %v2683, %v2733
    %v2735 = vadd.s32 %v2730, 4294967288
    %v2736 = vlaneseq
    %v2737 = vshrl.u32 %v2736, 7
    %v2738 = vsub.s32 %v2735, %v2737
    %v2739 = vrot.slane %v2686, %v2738
    %vm2740 = vcmask 130112
    %v2741 = vsel %vm2740, %v2739, %v2734
    %v2742 = vadd.s32 %v2730, 4294967280
    %v2743 = vlaneseq
    %v2744 = vshrl.u32 %v2743, 7
    %v2745 = vsub.s32 %v2742, %v2744
    %v2746 = vrot.slane %v2689, %v2745
    %vm2747 = vcmask 195712
    %v2748 = vsel %vm2747, %v2746, %v2741
    %v2749 = vadd.s32 %v2730, 4294967272
    %v2750 = vlaneseq
    %v2751 = vshrl.u32 %v2750, 7
    %v2752 = vsub.s32 %v2749, %v2751
    %v2753 = vrot.slane %v2692, %v2752
    %vm2754 = vcmask 261312
    %v2755 = vsel %vm2754, %v2753, %v2748
    %v2756 = vadd.s32 %v2730, 4294967264
    %v2757 = vlaneseq
    %v2758 = vshrl.u32 %v2757, 7
    %v2759 = vsub.s32 %v2756, %v2758
    %v2760 = vrot.slane %v2695, %v2759
    %vm2761 = vcmask 326912
    %v2762 = vsel %vm2761, %v2760, %v2755
    %v2763 = vadd.s32 %v2730, 4294967256
    %v2764 = vlaneseq
    %v2765 = vshrl.u32 %v2764, 7
    %v2766 = vsub.s32 %v2763, %v2765
    %v2767 = vrot.slane %v2698, %v2766
    %vm2768 = vcmask 392512
    %v2769 = vsel %vm2768, %v2767, %v2762
    %v2770 = vadd.s32 %v2730, 4294967248
    %v2771 = vlaneseq
    %v2772 = vshrl.u32 %v2771, 7
    %v2773 = vsub.s32 %v2770, %v2772
    %v2774 = vrot.slane %v2701, %v2773
    %vm2775 = vcmask 458112
    %v2776 = vsel %vm2775, %v2774, %v2769
    %v2777 = vadd.s32 %v2730, 4294967240
    %v2778 = vlaneseq
    %v2779 = vshrl.u32 %v2778, 7
    %v2780 = vsub.s32 %v2777, %v2779
    %v2781 = vrot.slane %v2704, %v2780
    %vm2782 = vcmask 523712
    %v2783 = vsel %vm2782, %v2781, %v2776
    %v2784 = vadd.s32 %v2730, 4294967232
    %v2785 = vlaneseq
    %v2786 = vshrl.u32 %v2785, 7
    %v2787 = vsub.s32 %v2784, %v2786
    %v2788 = vrot.slane %v2707, %v2787
    %vm2789 = vcmask 589312
    %v2790 = vsel %vm2789, %v2788, %v2783
    %v2791 = vadd.s32 %v2730, 4294967224
    %v2792 = vlaneseq
    %v2793 = vshrl.u32 %v2792, 7
    %v2794 = vsub.s32 %v2791, %v2793
    %v2795 = vrot.slane %v2710, %v2794
    %vm2796 = vcmask 654912
    %v2797 = vsel %vm2796, %v2795, %v2790
    %v2798 = vadd.s32 %v2730, 4294967216
    %v2799 = vlaneseq
    %v2800 = vshrl.u32 %v2799, 7
    %v2801 = vsub.s32 %v2798, %v2800
    %v2802 = vrot.slane %v2713, %v2801
    %vm2803 = vcmask 720512
    %v2804 = vsel %vm2803, %v2802, %v2797
    %v2805 = vadd.s32 %v2730, 4294967208
    %v2806 = vlaneseq
    %v2807 = vshrl.u32 %v2806, 7
    %v2808 = vsub.s32 %v2805, %v2807
    %v2809 = vrot.slane %v2716, %v2808
    %vm2810 = vcmask 786112
    %v2811 = vsel %vm2810, %v2809, %v2804
    %v2812 = vadd.s32 %v2730, 4294967200
    %v2813 = vlaneseq
    %v2814 = vshrl.u32 %v2813, 7
    %v2815 = vsub.s32 %v2812, %v2814
    %v2816 = vrot.slane %v2719, %v2815
    %vm2817 = vcmask 851712
    %v2818 = vsel %vm2817, %v2816, %v2811
    %v2819 = vadd.s32 %v2730, 4294967192
    %v2820 = vlaneseq
    %v2821 = vshrl.u32 %v2820, 7
    %v2822 = vsub.s32 %v2819, %v2821
    %v2823 = vrot.slane %v2722, %v2822
    %vm2824 = vcmask 917312
    %v2825 = vsel %vm2824, %v2823, %v2818
    %v2826 = vadd.s32 %v2730, 4294967184
    %v2827 = vlaneseq
    %v2828 = vshrl.u32 %v2827, 7
    %v2829 = vsub.s32 %v2826, %v2828
    %v2830 = vrot.slane %v2725, %v2829
    %vm2831 = vcmask 982912
    %v2832 = vsel %vm2831, %v2830, %v2825
    %v2833 = vadd.s32 %v2730, 4294967176
    %v2834 = vlaneseq
    %v2835 = vshrl.u32 %v2834, 7
    %v2836 = vsub.s32 %v2833, %v2835
    %v2837 = vrot.slane %v2728, %v2836
    %vm2838 = vcmask 1048512
    %v2839 = vsel %vm2838, %v2837, %v2832
    %2841 = vst [vmem:[%s7] sm:$0x1] %v2839
    // Predicated region
    $region34: #{discriminator_forward.1} parent=1 // pred_check
      _
    $region35: #{discriminator_forward.1} parent=1 // pred_check_branch
      %2843 = sbr.rel (0) target = $region37
    $region36: #{discriminator_forward.1} parent=1 // pred_region
      _
    $region37: #{discriminator_forward.1} parent=1 // pred_fallthru
      _
    // Predicated region
    $region38: #{discriminator_forward.1} parent=1 // pred_check
      _
    $region39: #{discriminator_forward.1} parent=1 // pred_check_branch
      %2845 = sbr.rel (0) target = $region41
    $region40: #{discriminator_forward.1} parent=1 // pred_region
      _
    $region41: #{discriminator_forward.1} parent=1 // pred_fallthru
      _
    %2846 = vsyncpa [#allocation3], 1

</llo_original>
